<compile_context>
chip_gen: v7x
topology: tpu7x:2x2x1
jax: 0.10.0
libtpu: 0.0.40
codegen_flags: <defaults>
</compile_context>

<pallas_src>
import jax
import jax.numpy as jnp
from jax import lax
from jax.experimental import pallas as pl
from jax.experimental.pallas import tpu as pltpu

EMB_DIM = 128
LAYER_OUT = 4
OUT_DIM = 2
NN_LAYERS = 4
BN_EPS = 1e-5


# ----------------------------- Pallas kernel ---------------------------------

def flocking_kernel(
    dst_ref, hi_ref, hj_ref, h_ref,
    # mlp_msg (BN folded, first layer split): W1i, W1j, b1, W2, b2, W3, b3, W4, b4
    mW1i, mW1j, mb1, mW2, mb2, mW3, mb3, mW4, mb4,
    # mlp_upd (BN folded, first layer split): W1h, W1a, b1, W2, b2, W3, b3, W4, b4
    uW1h, uW1a, ub1, uW2, ub2, uW3, ub3, uW4, ub4,
    wp_ref, bp_ref,
    out_ref,
    acc_ref,  # (N, LAYER_OUT) f32 scratch: scatter-add accumulator
):
    e = pl.program_id(0)
    f32 = jnp.float32
    bf16 = jnp.bfloat16

    @pl.when(e == 0)
    def _init():
        acc_ref[...] = jnp.zeros_like(acc_ref)

    def layer(x_bf16, w_ref, b_ref):
        y = jnp.dot(x_bf16, w_ref[...], preferred_element_type=f32) + b_ref[...]
        return jnp.tanh(y)

    # ---------- message MLP on this edge tile (bf16 MXU, f32 accumulate) ----------
    y1 = (jnp.dot(hi_ref[...], mW1i[...], preferred_element_type=f32)
          + jnp.dot(hj_ref[...], mW1j[...], preferred_element_type=f32)
          + mb1[...])
    x = jnp.tanh(y1).astype(bf16)
    x = layer(x, mW2, mb2).astype(bf16)
    x = layer(x, mW3, mb3).astype(bf16)
    msg = layer(x, mW4, mb4).astype(bf16)                       # (TE, LAYER_OUT)

    # ---------- scatter_add(msg, dst) as an in-kernel one-hot MXU matmul ----------
    te = msg.shape[0]
    n_nodes = acc_ref.shape[0]
    node_ids = lax.broadcasted_iota(jnp.int32, (te, n_nodes), 1)
    onehot = (node_ids == dst_ref[...]).astype(bf16)            # (TE, N); padded dst=-1 -> 0
    acc_ref[...] += lax.dot_general(
        onehot, msg,
        dimension_numbers=(((0,), (0,)), ((), ())),             # contract TE axis
        preferred_element_type=f32)                             # (N, LAYER_OUT)

    # ---------- node phase: update MLP + prediction head on the last tile ----------
    @pl.when(e == pl.num_programs(0) - 1)
    def _finalize():
        h = h_ref[...]                                          # (N, 4) bf16
        aggr = acc_ref[...].astype(bf16)                        # (N, LAYER_OUT)
        z1 = (jnp.dot(h, uW1h[...], preferred_element_type=f32)
              + jnp.dot(aggr, uW1a[...], preferred_element_type=f32)
              + ub1[...])
        z = jnp.tanh(z1).astype(bf16)
        z = layer(z, uW2, ub2).astype(bf16)
        z = layer(z, uW3, ub3).astype(bf16)
        upd = layer(z, uW4, ub4)                                # (N, LAYER_OUT) f32
        out_ref[...] = (jnp.dot(upd, wp_ref[...], preferred_element_type=f32)
                        + bp_ref[...])
    # TODO(synk): for very large N, tile the node phase (second grid axis marked
    # "parallel") to engage both TensorCores on v7x and keep the accumulator tiled.


# ------------------------------ JAX wrapper -----------------------------------

def _fold_mlp(raw_params):
    """Fold eval-mode BatchNorm affine into each Linear: W'=W*sc, b'=b*sc+sh."""
    folded = []
    for layer_idx in range(NN_LAYERS):
        w, b, sc, sh = raw_params[4 * layer_idx:4 * layer_idx + 4]
        folded.append(((w * sc).astype(jnp.float32),
                       (b * sc + sh).astype(jnp.float32)))
    return folded


def one_aggr_mpnn_flocking_forward(pos, vel, edge_index, params, *, edge_tile=512):
    msg_params, upd_params, (wp, bp) = params
    bf16 = jnp.bfloat16

    h = jnp.concatenate([pos, vel], axis=-1).astype(jnp.float32)      # (N, 4)
    n_nodes = h.shape[0]
    src = edge_index[0].astype(jnp.int32)
    dst = edge_index[1].astype(jnp.int32)
    n_edges = src.shape[0]

    # ---- edge tiling (pad with dst=-1 so padded edges contribute nothing) ----
    te = max(8, (min(edge_tile, n_edges) // 8) * 8)
    e_pad = pl.cdiv(n_edges, te) * te
    pad = e_pad - n_edges
    dst_col = jnp.pad(dst, (0, pad), constant_values=-1).reshape(e_pad, 1)
    h_i = jnp.pad(h[dst], ((0, pad), (0, 0))).astype(bf16)            # target nodes
    h_j = jnp.pad(h[src], ((0, pad), (0, 0))).astype(bf16)            # source nodes
    h_bf = h.astype(bf16)

    # ---- fold BN into the Linears, split 8-wide first layers, cast to bf16 ----
    (mW1, mb1), (mW2, mb2), (mW3, mb3), (mW4, mb4) = _fold_mlp(msg_params)
    (uW1, ub1), (uW2, ub2), (uW3, ub3), (uW4, ub4) = _fold_mlp(upd_params)
    msg_weights = [mW1[:4].astype(bf16), mW1[4:].astype(bf16), mb1,
                   mW2.astype(bf16), mb2, mW3.astype(bf16), mb3,
                   mW4.astype(bf16), mb4]
    upd_weights = [uW1[:4].astype(bf16), uW1[4:].astype(bf16), ub1,
                   uW2.astype(bf16), ub2, uW3.astype(bf16), ub3,
                   uW4.astype(bf16), ub4]

    inputs = ([dst_col, h_i, h_j, h_bf] + msg_weights + upd_weights
              + [wp.astype(jnp.float32), bp.astype(jnp.float32)])

    def edge_spec(cols):
        return pl.BlockSpec((te, cols), lambda e: (e, 0))

    def full_spec(shape):
        nd = len(shape)
        return pl.BlockSpec(shape, lambda e, _nd=nd: (0,) * _nd)

    in_specs = [edge_spec(1), edge_spec(4), edge_spec(4), full_spec((n_nodes, 4))]
    in_specs += [full_spec(a.shape) for a in inputs[4:]]

    n_tiles = e_pad // te
    return pl.pallas_call(
        flocking_kernel,
        out_shape=jax.ShapeDtypeStruct((n_nodes, OUT_DIM), jnp.float32),
        grid_spec=pltpu.PrefetchScalarGridSpec(
            num_scalar_prefetch=0,
            grid=(n_tiles,),
            in_specs=in_specs,
            out_specs=full_spec((n_nodes, OUT_DIM)),
            scratch_shapes=[pltpu.VMEM((n_nodes, LAYER_OUT), jnp.float32)],
        ),
        compiler_params=pltpu.CompilerParams(
            dimension_semantics=("arbitrary",),          # edge axis is a reduction
            vmem_limit_bytes=32 * 1024 * 1024,
        ),
    )(*inputs)


# --------------------------- parameter construction ---------------------------

def _init_linear(key, fan_in, fan_out):
    kw, kb = jax.random.split(key)
    bound = 1.0 / float(fan_in) ** 0.5
    w = jax.random.uniform(kw, (fan_in, fan_out), jnp.float32, -bound, bound)  # transposed
    b = jax.random.uniform(kb, (1, fan_out), jnp.float32, -bound, bound)
    return w, b


def _init_bn(key, dim):
    k1, k2, k3, k4 = jax.random.split(key, 4)
    gamma = jax.random.uniform(k1, (1, dim), jnp.float32, 0.5, 1.5)
    beta = jax.random.uniform(k2, (1, dim), jnp.float32, -0.1, 0.1)
    mean = jax.random.uniform(k3, (1, dim), jnp.float32, -0.1, 0.1)
    var = jax.random.uniform(k4, (1, dim), jnp.float32, 0.5, 1.5)
    scale = gamma / jnp.sqrt(var + BN_EPS)
    shift = beta - mean * scale
    return scale, shift


def _init_mlp(key, in_dim, emb_dim, out_dim, nn_layers):
    dims = [(in_dim, emb_dim)] + [(emb_dim, emb_dim)] * (nn_layers - 2) + [(emb_dim, out_dim)]
    params = []
    for fi, fo in dims:
        key, k1, k2 = jax.random.split(key, 3)
        w, b = _init_linear(k1, fi, fo)
        sc, sh = _init_bn(k2, fo)
        params += [w, b, sc, sh]
    return params


def init_params(key):
    k1, k2, k3 = jax.random.split(key, 3)
    msg_params = _init_mlp(k1, 8, EMB_DIM, LAYER_OUT, NN_LAYERS)                 # mlp_msg
    upd_params = _init_mlp(k2, LAYER_OUT + 4, EMB_DIM, LAYER_OUT, NN_LAYERS)     # mlp_upd
    wp, bp = _init_linear(k3, LAYER_OUT, OUT_DIM)                                # lin_pred
    return msg_params, upd_params, (wp, bp)


# ------------------------------ pure-JAX reference -----------------------------

def _ref_mlp(x, params):
    for layer_idx in range(NN_LAYERS):
        w, b, sc, sh = params[4 * layer_idx:4 * layer_idx + 4]
        x = jnp.tanh((x @ w + b) * sc + sh)
    return x


def ref_forward(pos, vel, edge_index, params):
    msg_params, upd_params, (wp, bp) = params
    h = jnp.concatenate([pos, vel], axis=-1)
    src, dst = edge_index[0], edge_index[1]
    he = jnp.concatenate([h[dst], h[src]], axis=-1)
    msg = _ref_mlp(he, msg_params)
    aggr = jnp.zeros((h.shape[0], LAYER_OUT), jnp.float32).at[dst].add(msg)
    upd = _ref_mlp(jnp.concatenate([h, aggr], axis=-1), upd_params)
    return upd @ wp + bp


# ----------------------------------- main --------------------------------------

if __name__ == "__main__":
    key = jax.random.PRNGKey(0)
    kp, kv, kparams = jax.random.split(key, 3)

    N = 16                              # nodes
    # ring graph: each node receives from its +-1, +-2 neighbours -> E = 64 edges
    src_l, dst_l = [], []
    for n in range(N):
        for o in (-2, -1, 1, 2):
            src_l.append((n + o) % N)
            dst_l.append(n)
    edge_index = jnp.array([src_l, dst_l], dtype=jnp.int32)   # (2, 64): row0=src, row1=dst

    pos = jax.random.normal(kp, (N, 2), jnp.float32)          # data.pos
    vel = jax.random.normal(kv, (N, 2), jnp.float32)          # data.vel

    params = init_params(kparams)

    # edge_tile=32 -> 2 pipelined edge tiles over the 64 edges
    out = one_aggr_mpnn_flocking_forward(pos, vel, edge_index, params, edge_tile=32)
    out = jax.block_until_ready(out)

    ref = ref_forward(pos, vel, edge_index, params)
    assert out.shape == (N, OUT_DIM)
    assert bool(jnp.all(jnp.isfinite(out)))
    assert bool(jnp.allclose(out, ref, atol=1e-2, rtol=1e-2))

    print("KERNEL_OK")
</pallas_src>

<mosaic_0001>
module attributes {stable_mosaic.version = 11 : i64} {
  func.func @flocking_kernel(%arg0: i32, %arg1: memref<32x1xi32, #tpu.memory_space<vmem>>, %arg2: memref<32x4xbf16, #tpu.memory_space<vmem>>, %arg3: memref<32x4xbf16, #tpu.memory_space<vmem>>, %arg4: memref<16x4xbf16, #tpu.memory_space<vmem>>, %arg5: memref<4x128xbf16, #tpu.memory_space<vmem>>, %arg6: memref<4x128xbf16, #tpu.memory_space<vmem>>, %arg7: memref<1x128xf32, #tpu.memory_space<vmem>>, %arg8: memref<128x128xbf16, #tpu.memory_space<vmem>>, %arg9: memref<1x128xf32, #tpu.memory_space<vmem>>, %arg10: memref<128x128xbf16, #tpu.memory_space<vmem>>, %arg11: memref<1x128xf32, #tpu.memory_space<vmem>>, %arg12: memref<128x4xbf16, #tpu.memory_space<vmem>>, %arg13: memref<1x4xf32, #tpu.memory_space<vmem>>, %arg14: memref<4x128xbf16, #tpu.memory_space<vmem>>, %arg15: memref<4x128xbf16, #tpu.memory_space<vmem>>, %arg16: memref<1x128xf32, #tpu.memory_space<vmem>>, %arg17: memref<128x128xbf16, #tpu.memory_space<vmem>>, %arg18: memref<1x128xf32, #tpu.memory_space<vmem>>, %arg19: memref<128x128xbf16, #tpu.memory_space<vmem>>, %arg20: memref<1x128xf32, #tpu.memory_space<vmem>>, %arg21: memref<128x4xbf16, #tpu.memory_space<vmem>>, %arg22: memref<1x4xf32, #tpu.memory_space<vmem>>, %arg23: memref<4x2xf32, #tpu.memory_space<vmem>>, %arg24: memref<1x2xf32, #tpu.memory_space<vmem>>, %arg25: memref<16x2xf32, #tpu.memory_space<vmem>>, %arg26: memref<16x4xf32, #tpu.memory_space<vmem>>) attributes {dimension_semantics = [#tpu.dimension_semantics<arbitrary>], iteration_bounds = array<i64: 2>, scalar_prefetch = 0 : i64, scratch_operands = 1 : i64, tpu.core_type = #tpu.core_type<tc>, window_params = [{transform_indices = @transform_0, window_bounds = array<i64: 32, 1>}, {transform_indices = @transform_1, window_bounds = array<i64: 32, 4>}, {transform_indices = @transform_2, window_bounds = array<i64: 32, 4>}, {pipeline_mode = #tpu.pipeline_mode<synchronous>, transform_indices = @transform_3, window_bounds = array<i64: 16, 4>}, {pipeline_mode = #tpu.pipeline_mode<synchronous>, transform_indices = @transform_4, window_bounds = array<i64: 4, 128>}, {pipeline_mode = #tpu.pipeline_mode<synchronous>, transform_indices = @transform_5, window_bounds = array<i64: 4, 128>}, {pipeline_mode = #tpu.pipeline_mode<synchronous>, transform_indices = @transform_6, window_bounds = array<i64: 1, 128>}, {pipeline_mode = #tpu.pipeline_mode<synchronous>, transform_indices = @transform_7, window_bounds = array<i64: 128, 128>}, {pipeline_mode = #tpu.pipeline_mode<synchronous>, transform_indices = @transform_8, window_bounds = array<i64: 1, 128>}, {pipeline_mode = #tpu.pipeline_mode<synchronous>, transform_indices = @transform_9, window_bounds = array<i64: 128, 128>}, {pipeline_mode = #tpu.pipeline_mode<synchronous>, transform_indices = @transform_10, window_bounds = array<i64: 1, 128>}, {pipeline_mode = #tpu.pipeline_mode<synchronous>, transform_indices = @transform_11, window_bounds = array<i64: 128, 4>}, {pipeline_mode = #tpu.pipeline_mode<synchronous>, transform_indices = @transform_12, window_bounds = array<i64: 1, 4>}, {pipeline_mode = #tpu.pipeline_mode<synchronous>, transform_indices = @transform_13, window_bounds = array<i64: 4, 128>}, {pipeline_mode = #tpu.pipeline_mode<synchronous>, transform_indices = @transform_14, window_bounds = array<i64: 4, 128>}, {pipeline_mode = #tpu.pipeline_mode<synchronous>, transform_indices = @transform_15, window_bounds = array<i64: 1, 128>}, {pipeline_mode = #tpu.pipeline_mode<synchronous>, transform_indices = @transform_16, window_bounds = array<i64: 128, 128>}, {pipeline_mode = #tpu.pipeline_mode<synchronous>, transform_indices = @transform_17, window_bounds = array<i64: 1, 128>}, {pipeline_mode = #tpu.pipeline_mode<synchronous>, transform_indices = @transform_18, window_bounds = array<i64: 128, 128>}, {pipeline_mode = #tpu.pipeline_mode<synchronous>, transform_indices = @transform_19, window_bounds = array<i64: 1, 128>}, {pipeline_mode = #tpu.pipeline_mode<synchronous>, transform_indices = @transform_20, window_bounds = array<i64: 128, 4>}, {pipeline_mode = #tpu.pipeline_mode<synchronous>, transform_indices = @transform_21, window_bounds = array<i64: 1, 4>}, {pipeline_mode = #tpu.pipeline_mode<synchronous>, transform_indices = @transform_22, window_bounds = array<i64: 4, 2>}, {pipeline_mode = #tpu.pipeline_mode<synchronous>, transform_indices = @transform_23, window_bounds = array<i64: 1, 2>}, {pipeline_mode = #tpu.pipeline_mode<synchronous>, transform_indices = @transform_24, window_bounds = array<i64: 16, 2>}]} {
    %c0_i32 = arith.constant 0 : i32
    %0 = arith.cmpi eq, %arg0, %c0_i32 : i32
    %1 = arith.extui %0 : i1 to i32
    %c0_i32_0 = arith.constant 0 : i32
    %2 = arith.cmpi ne, %1, %c0_i32_0 : i32
    scf.if %2 {
      %cst_34 = arith.constant 0.000000e+00 : f32
      %50 = vector.broadcast %cst_34 : f32 to vector<16x4xf32>
      %c0_35 = arith.constant 0 : index
      %c0_36 = arith.constant 0 : index
      %51 = vector.load %arg26[%c0_35, %c0_36] : memref<16x4xf32, #tpu.memory_space<vmem>>, vector<16x4xf32>
      tpu.vector_store %arg26[%c0_35, %c0_36], %50 {strides = array<i32>} : memref<16x4xf32, #tpu.memory_space<vmem>>, vector<16x4xf32>,
    } else {
    }
    %c0 = arith.constant 0 : index
    %c0_1 = arith.constant 0 : index
    %3 = vector.load %arg2[%c0, %c0_1] : memref<32x4xbf16, #tpu.memory_space<vmem>>, vector<32x4xbf16>
    %c0_2 = arith.constant 0 : index
    %c0_3 = arith.constant 0 : index
    %4 = vector.load %arg5[%c0_2, %c0_3] : memref<4x128xbf16, #tpu.memory_space<vmem>>, vector<4x128xbf16>
    %cst = arith.constant dense<0.000000e+00> : vector<32x128xf32>
    %5 = tpu.matmul %3, %4, %cst {dimension_numbers = #tpu.dot_dimension_numbers<[1], [0], [0], [1], [0, 0, 1, 1], [], []>} : vector<32x4xbf16>, vector<4x128xbf16>, vector<32x128xf32> -> vector<32x128xf32>
    %c0_4 = arith.constant 0 : index
    %c0_5 = arith.constant 0 : index
    %6 = vector.load %arg3[%c0_4, %c0_5] : memref<32x4xbf16, #tpu.memory_space<vmem>>, vector<32x4xbf16>
    %c0_6 = arith.constant 0 : index
    %c0_7 = arith.constant 0 : index
    %7 = vector.load %arg6[%c0_6, %c0_7] : memref<4x128xbf16, #tpu.memory_space<vmem>>, vector<4x128xbf16>
    %cst_8 = arith.constant dense<0.000000e+00> : vector<32x128xf32>
    %8 = tpu.matmul %6, %7, %cst_8 {dimension_numbers = #tpu.dot_dimension_numbers<[1], [0], [0], [1], [0, 0, 1, 1], [], []>} : vector<32x4xbf16>, vector<4x128xbf16>, vector<32x128xf32> -> vector<32x128xf32>
    %9 = arith.addf %5, %8 : vector<32x128xf32>
    %c0_9 = arith.constant 0 : index
    %c0_10 = arith.constant 0 : index
    %10 = vector.load %arg7[%c0_9, %c0_10] : memref<1x128xf32, #tpu.memory_space<vmem>>, vector<1x128xf32>
    %11 = vector.broadcast %10 : vector<1x128xf32> to vector<32x128xf32>
    %12 = arith.addf %9, %11 : vector<32x128xf32>
    %13 = math.tanh %12 : vector<32x128xf32>
    %14 = arith.truncf %13 : vector<32x128xf32> to vector<32x128xbf16>
    %c0_11 = arith.constant 0 : index
    %c0_12 = arith.constant 0 : index
    %15 = vector.load %arg8[%c0_11, %c0_12] : memref<128x128xbf16, #tpu.memory_space<vmem>>, vector<128x128xbf16>
    %cst_13 = arith.constant dense<0.000000e+00> : vector<32x128xf32>
    %16 = tpu.matmul %14, %15, %cst_13 {dimension_numbers = #tpu.dot_dimension_numbers<[1], [0], [0], [1], [0, 0, 1, 1], [], []>} : vector<32x128xbf16>, vector<128x128xbf16>, vector<32x128xf32> -> vector<32x128xf32>
    %c0_14 = arith.constant 0 : index
    %c0_15 = arith.constant 0 : index
    %17 = vector.load %arg9[%c0_14, %c0_15] : memref<1x128xf32, #tpu.memory_space<vmem>>, vector<1x128xf32>
    %18 = vector.broadcast %17 : vector<1x128xf32> to vector<32x128xf32>
    %19 = arith.addf %16, %18 : vector<32x128xf32>
    %20 = math.tanh %19 : vector<32x128xf32>
    %21 = arith.truncf %20 : vector<32x128xf32> to vector<32x128xbf16>
    %c0_16 = arith.constant 0 : index
    %c0_17 = arith.constant 0 : index
    %22 = vector.load %arg10[%c0_16, %c0_17] : memref<128x128xbf16, #tpu.memory_space<vmem>>, vector<128x128xbf16>
    %cst_18 = arith.constant dense<0.000000e+00> : vector<32x128xf32>
    %23 = tpu.matmul %21, %22, %cst_18 {dimension_numbers = #tpu.dot_dimension_numbers<[1], [0], [0], [1], [0, 0, 1, 1], [], []>} : vector<32x128xbf16>, vector<128x128xbf16>, vector<32x128xf32> -> vector<32x128xf32>
    %c0_19 = arith.constant 0 : index
    %c0_20 = arith.constant 0 : index
    %24 = vector.load %arg11[%c0_19, %c0_20] : memref<1x128xf32, #tpu.memory_space<vmem>>, vector<1x128xf32>
    %25 = vector.broadcast %24 : vector<1x128xf32> to vector<32x128xf32>
    %26 = arith.addf %23, %25 : vector<32x128xf32>
    %27 = math.tanh %26 : vector<32x128xf32>
    %28 = arith.truncf %27 : vector<32x128xf32> to vector<32x128xbf16>
    %c0_21 = arith.constant 0 : index
    %c0_22 = arith.constant 0 : index
    %29 = vector.load %arg12[%c0_21, %c0_22] : memref<128x4xbf16, #tpu.memory_space<vmem>>, vector<128x4xbf16>
    %cst_23 = arith.constant dense<0.000000e+00> : vector<32x4xf32>
    %30 = tpu.matmul %28, %29, %cst_23 {dimension_numbers = #tpu.dot_dimension_numbers<[1], [0], [0], [1], [0, 0, 1, 1], [], []>} : vector<32x128xbf16>, vector<128x4xbf16>, vector<32x4xf32> -> vector<32x4xf32>
    %c0_24 = arith.constant 0 : index
    %c0_25 = arith.constant 0 : index
    %31 = vector.load %arg13[%c0_24, %c0_25] : memref<1x4xf32, #tpu.memory_space<vmem>>, vector<1x4xf32>
    %32 = vector.broadcast %31 : vector<1x4xf32> to vector<32x4xf32>
    %33 = arith.addf %30, %32 : vector<32x4xf32>
    %34 = math.tanh %33 : vector<32x4xf32>
    %35 = arith.truncf %34 : vector<32x4xf32> to vector<32x4xbf16>
    %36 = tpu.iota {dimensions = array<i32: 1>} : vector<32x16xi32>
    %c0_26 = arith.constant 0 : index
    %c0_27 = arith.constant 0 : index
    %37 = vector.load %arg1[%c0_26, %c0_27] : memref<32x1xi32, #tpu.memory_space<vmem>>, vector<32x1xi32>
    %38 = vector.broadcast %37 : vector<32x1xi32> to vector<32x16xi32>
    %39 = arith.cmpi eq, %36, %38 : vector<32x16xi32>
    %40 = arith.extui %39 : vector<32x16xi1> to vector<32x16xi32>
    %41 = arith.sitofp %40 : vector<32x16xi32> to vector<32x16xf32>
    %42 = arith.truncf %41 : vector<32x16xf32> to vector<32x16xbf16>
    %c0_28 = arith.constant 0 : index
    %c0_29 = arith.constant 0 : index
    %43 = vector.load %arg26[%c0_28, %c0_29] : memref<16x4xf32, #tpu.memory_space<vmem>>, vector<16x4xf32>
    %cst_30 = arith.constant dense<0.000000e+00> : vector<16x4xf32>
    %44 = tpu.matmul %42, %35, %cst_30 {dimension_numbers = #tpu.dot_dimension_numbers<[0], [0], [1], [1], [0, 1, 1, 1], [], []>} : vector<32x16xbf16>, vector<32x4xbf16>, vector<16x4xf32> -> vector<16x4xf32>
    %45 = arith.addf %43, %44 : vector<16x4xf32>
    %c0_31 = arith.constant 0 : index
    %c0_32 = arith.constant 0 : index
    %46 = vector.load %arg26[%c0_31, %c0_32] : memref<16x4xf32, #tpu.memory_space<vmem>>, vector<16x4xf32>
    tpu.vector_store %arg26[%c0_31, %c0_32], %45 {strides = array<i32>} : memref<16x4xf32, #tpu.memory_space<vmem>>, vector<16x4xf32>,
    %c1_i32 = arith.constant 1 : i32
    %47 = arith.cmpi eq, %arg0, %c1_i32 : i32
    %48 = arith.extui %47 : i1 to i32
    %c0_i32_33 = arith.constant 0 : i32
    %49 = arith.cmpi ne, %48, %c0_i32_33 : i32
    scf.if %49 {
      %c0_34 = arith.constant 0 : index
      %c0_35 = arith.constant 0 : index
      %50 = vector.load %arg4[%c0_34, %c0_35] : memref<16x4xbf16, #tpu.memory_space<vmem>>, vector<16x4xbf16>
      %c0_36 = arith.constant 0 : index
      %c0_37 = arith.constant 0 : index
      %51 = vector.load %arg26[%c0_36, %c0_37] : memref<16x4xf32, #tpu.memory_space<vmem>>, vector<16x4xf32>
      %52 = arith.truncf %51 : vector<16x4xf32> to vector<16x4xbf16>
      %c0_38 = arith.constant 0 : index
      %c0_39 = arith.constant 0 : index
      %53 = vector.load %arg14[%c0_38, %c0_39] : memref<4x128xbf16, #tpu.memory_space<vmem>>, vector<4x128xbf16>
      %cst_40 = arith.constant dense<0.000000e+00> : vector<16x128xf32>
      %54 = tpu.matmul %50, %53, %cst_40 {dimension_numbers = #tpu.dot_dimension_numbers<[1], [0], [0], [1], [0, 0, 1, 1], [], []>} : vector<16x4xbf16>, vector<4x128xbf16>, vector<16x128xf32> -> vector<16x128xf32>
      %c0_41 = arith.constant 0 : index
      %c0_42 = arith.constant 0 : index
      %55 = vector.load %arg15[%c0_41, %c0_42] : memref<4x128xbf16, #tpu.memory_space<vmem>>, vector<4x128xbf16>
      %cst_43 = arith.constant dense<0.000000e+00> : vector<16x128xf32>
      %56 = tpu.matmul %52, %55, %cst_43 {dimension_numbers = #tpu.dot_dimension_numbers<[1], [0], [0], [1], [0, 0, 1, 1], [], []>} : vector<16x4xbf16>, vector<4x128xbf16>, vector<16x128xf32> -> vector<16x128xf32>
      %57 = arith.addf %54, %56 : vector<16x128xf32>
      %c0_44 = arith.constant 0 : index
      %c0_45 = arith.constant 0 : index
      %58 = vector.load %arg16[%c0_44, %c0_45] : memref<1x128xf32, #tpu.memory_space<vmem>>, vector<1x128xf32>
      %59 = vector.broadcast %58 : vector<1x128xf32> to vector<16x128xf32>
      %60 = arith.addf %57, %59 : vector<16x128xf32>
      %61 = math.tanh %60 : vector<16x128xf32>
      %62 = arith.truncf %61 : vector<16x128xf32> to vector<16x128xbf16>
      %c0_46 = arith.constant 0 : index
      %c0_47 = arith.constant 0 : index
      %63 = vector.load %arg17[%c0_46, %c0_47] : memref<128x128xbf16, #tpu.memory_space<vmem>>, vector<128x128xbf16>
      %cst_48 = arith.constant dense<0.000000e+00> : vector<16x128xf32>
      %64 = tpu.matmul %62, %63, %cst_48 {dimension_numbers = #tpu.dot_dimension_numbers<[1], [0], [0], [1], [0, 0, 1, 1], [], []>} : vector<16x128xbf16>, vector<128x128xbf16>, vector<16x128xf32> -> vector<16x128xf32>
      %c0_49 = arith.constant 0 : index
      %c0_50 = arith.constant 0 : index
      %65 = vector.load %arg18[%c0_49, %c0_50] : memref<1x128xf32, #tpu.memory_space<vmem>>, vector<1x128xf32>
      %66 = vector.broadcast %65 : vector<1x128xf32> to vector<16x128xf32>
      %67 = arith.addf %64, %66 : vector<16x128xf32>
      %68 = math.tanh %67 : vector<16x128xf32>
      %69 = arith.truncf %68 : vector<16x128xf32> to vector<16x128xbf16>
      %c0_51 = arith.constant 0 : index
      %c0_52 = arith.constant 0 : index
      %70 = vector.load %arg19[%c0_51, %c0_52] : memref<128x128xbf16, #tpu.memory_space<vmem>>, vector<128x128xbf16>
      %cst_53 = arith.constant dense<0.000000e+00> : vector<16x128xf32>
      %71 = tpu.matmul %69, %70, %cst_53 {dimension_numbers = #tpu.dot_dimension_numbers<[1], [0], [0], [1], [0, 0, 1, 1], [], []>} : vector<16x128xbf16>, vector<128x128xbf16>, vector<16x128xf32> -> vector<16x128xf32>
      %c0_54 = arith.constant 0 : index
      %c0_55 = arith.constant 0 : index
      %72 = vector.load %arg20[%c0_54, %c0_55] : memref<1x128xf32, #tpu.memory_space<vmem>>, vector<1x128xf32>
      %73 = vector.broadcast %72 : vector<1x128xf32> to vector<16x128xf32>
      %74 = arith.addf %71, %73 : vector<16x128xf32>
      %75 = math.tanh %74 : vector<16x128xf32>
      %76 = arith.truncf %75 : vector<16x128xf32> to vector<16x128xbf16>
      %c0_56 = arith.constant 0 : index
      %c0_57 = arith.constant 0 : index
      %77 = vector.load %arg21[%c0_56, %c0_57] : memref<128x4xbf16, #tpu.memory_space<vmem>>, vector<128x4xbf16>
      %cst_58 = arith.constant dense<0.000000e+00> : vector<16x4xf32>
      %78 = tpu.matmul %76, %77, %cst_58 {dimension_numbers = #tpu.dot_dimension_numbers<[1], [0], [0], [1], [0, 0, 1, 1], [], []>} : vector<16x128xbf16>, vector<128x4xbf16>, vector<16x4xf32> -> vector<16x4xf32>
      %c0_59 = arith.constant 0 : index
      %c0_60 = arith.constant 0 : index
      %79 = vector.load %arg22[%c0_59, %c0_60] : memref<1x4xf32, #tpu.memory_space<vmem>>, vector<1x4xf32>
      %80 = vector.broadcast %79 : vector<1x4xf32> to vector<16x4xf32>
      %81 = arith.addf %78, %80 : vector<16x4xf32>
      %82 = math.tanh %81 : vector<16x4xf32>
      %c0_61 = arith.constant 0 : index
      %c0_62 = arith.constant 0 : index
      %83 = vector.load %arg23[%c0_61, %c0_62] : memref<4x2xf32, #tpu.memory_space<vmem>>, vector<4x2xf32>
      %cst_63 = arith.constant dense<0.000000e+00> : vector<16x2xf32>
      %84 = tpu.matmul %82, %83, %cst_63 {dimension_numbers = #tpu.dot_dimension_numbers<[1], [0], [0], [1], [0, 0, 1, 1], [], []>} : vector<16x4xf32>, vector<4x2xf32>, vector<16x2xf32> -> vector<16x2xf32>
      %c0_64 = arith.constant 0 : index
      %c0_65 = arith.constant 0 : index
      %85 = vector.load %arg24[%c0_64, %c0_65] : memref<1x2xf32, #tpu.memory_space<vmem>>, vector<1x2xf32>
      %86 = vector.broadcast %85 : vector<1x2xf32> to vector<16x2xf32>
      %87 = arith.addf %84, %86 : vector<16x2xf32>
      %c0_66 = arith.constant 0 : index
      %c0_67 = arith.constant 0 : index
      %88 = vector.load %arg25[%c0_66, %c0_67] : memref<16x2xf32, #tpu.memory_space<vmem>>, vector<16x2xf32>
      tpu.vector_store %arg25[%c0_66, %c0_67], %87 {strides = array<i32>} : memref<16x2xf32, #tpu.memory_space<vmem>>, vector<16x2xf32>,
    } else {
    }
    return
  }
  func.func @transform_0(%arg0: i32) -> (i32, i32) {
    %c0_i32 = arith.constant 0 : i32
    %c0_i32_0 = arith.constant 0 : i32
    return %arg0, %c0_i32 : i32, i32
  }
  func.func @transform_1(%arg0: i32) -> (i32, i32) {
    %c0_i32 = arith.constant 0 : i32
    %c0_i32_0 = arith.constant 0 : i32
    return %arg0, %c0_i32 : i32, i32
  }
  func.func @transform_2(%arg0: i32) -> (i32, i32) {
    %c0_i32 = arith.constant 0 : i32
    %c0_i32_0 = arith.constant 0 : i32
    return %arg0, %c0_i32 : i32, i32
  }
  func.func @transform_3(%arg0: i32) -> (i32, i32) {
    %c0_i32 = arith.constant 0 : i32
    %c0_i32_0 = arith.constant 0 : i32
    %c0_i32_1 = arith.constant 0 : i32
    return %c0_i32, %c0_i32_0 : i32, i32
  }
  func.func @transform_4(%arg0: i32) -> (i32, i32) {
    %c0_i32 = arith.constant 0 : i32
    %c0_i32_0 = arith.constant 0 : i32
    %c0_i32_1 = arith.constant 0 : i32
    return %c0_i32, %c0_i32_0 : i32, i32
  }
  func.func @transform_5(%arg0: i32) -> (i32, i32) {
    %c0_i32 = arith.constant 0 : i32
    %c0_i32_0 = arith.constant 0 : i32
    %c0_i32_1 = arith.constant 0 : i32
    return %c0_i32, %c0_i32_0 : i32, i32
  }
  func.func @transform_6(%arg0: i32) -> (i32, i32) {
    %c0_i32 = arith.constant 0 : i32
    %c0_i32_0 = arith.constant 0 : i32
    %c0_i32_1 = arith.constant 0 : i32
    return %c0_i32, %c0_i32_0 : i32, i32
  }
  func.func @transform_7(%arg0: i32) -> (i32, i32) {
    %c0_i32 = arith.constant 0 : i32
    %c0_i32_0 = arith.constant 0 : i32
    %c0_i32_1 = arith.constant 0 : i32
    return %c0_i32, %c0_i32_0 : i32, i32
  }
  func.func @transform_8(%arg0: i32) -> (i32, i32) {
    %c0_i32 = arith.constant 0 : i32
    %c0_i32_0 = arith.constant 0 : i32
    %c0_i32_1 = arith.constant 0 : i32
    return %c0_i32, %c0_i32_0 : i32, i32
  }
  func.func @transform_9(%arg0: i32) -> (i32, i32) {
    %c0_i32 = arith.constant 0 : i32
    %c0_i32_0 = arith.constant 0 : i32
    %c0_i32_1 = arith.constant 0 : i32
    return %c0_i32, %c0_i32_0 : i32, i32
  }
  func.func @transform_10(%arg0: i32) -> (i32, i32) {
    %c0_i32 = arith.constant 0 : i32
    %c0_i32_0 = arith.constant 0 : i32
    %c0_i32_1 = arith.constant 0 : i32
    return %c0_i32, %c0_i32_0 : i32, i32
  }
  func.func @transform_11(%arg0: i32) -> (i32, i32) {
    %c0_i32 = arith.constant 0 : i32
    %c0_i32_0 = arith.constant 0 : i32
    %c0_i32_1 = arith.constant 0 : i32
    return %c0_i32, %c0_i32_0 : i32, i32
  }
  func.func @transform_12(%arg0: i32) -> (i32, i32) {
    %c0_i32 = arith.constant 0 : i32
    %c0_i32_0 = arith.constant 0 : i32
    %c0_i32_1 = arith.constant 0 : i32
    return %c0_i32, %c0_i32_0 : i32, i32
  }
  func.func @transform_13(%arg0: i32) -> (i32, i32) {
    %c0_i32 = arith.constant 0 : i32
    %c0_i32_0 = arith.constant 0 : i32
    %c0_i32_1 = arith.constant 0 : i32
    return %c0_i32, %c0_i32_0 : i32, i32
  }
  func.func @transform_14(%arg0: i32) -> (i32, i32) {
    %c0_i32 = arith.constant 0 : i32
    %c0_i32_0 = arith.constant 0 : i32
    %c0_i32_1 = arith.constant 0 : i32
    return %c0_i32, %c0_i32_0 : i32, i32
  }
  func.func @transform_15(%arg0: i32) -> (i32, i32) {
    %c0_i32 = arith.constant 0 : i32
    %c0_i32_0 = arith.constant 0 : i32
    %c0_i32_1 = arith.constant 0 : i32
    return %c0_i32, %c0_i32_0 : i32, i32
  }
  func.func @transform_16(%arg0: i32) -> (i32, i32) {
    %c0_i32 = arith.constant 0 : i32
    %c0_i32_0 = arith.constant 0 : i32
    %c0_i32_1 = arith.constant 0 : i32
    return %c0_i32, %c0_i32_0 : i32, i32
  }
  func.func @transform_17(%arg0: i32) -> (i32, i32) {
    %c0_i32 = arith.constant 0 : i32
    %c0_i32_0 = arith.constant 0 : i32
    %c0_i32_1 = arith.constant 0 : i32
    return %c0_i32, %c0_i32_0 : i32, i32
  }
  func.func @transform_18(%arg0: i32) -> (i32, i32) {
    %c0_i32 = arith.constant 0 : i32
    %c0_i32_0 = arith.constant 0 : i32
    %c0_i32_1 = arith.constant 0 : i32
    return %c0_i32, %c0_i32_0 : i32, i32
  }
  func.func @transform_19(%arg0: i32) -> (i32, i32) {
    %c0_i32 = arith.constant 0 : i32
    %c0_i32_0 = arith.constant 0 : i32
    %c0_i32_1 = arith.constant 0 : i32
    return %c0_i32, %c0_i32_0 : i32, i32
  }
  func.func @transform_20(%arg0: i32) -> (i32, i32) {
    %c0_i32 = arith.constant 0 : i32
    %c0_i32_0 = arith.constant 0 : i32
    %c0_i32_1 = arith.constant 0 : i32
    return %c0_i32, %c0_i32_0 : i32, i32
  }
  func.func @transform_21(%arg0: i32) -> (i32, i32) {
    %c0_i32 = arith.constant 0 : i32
    %c0_i32_0 = arith.constant 0 : i32
    %c0_i32_1 = arith.constant 0 : i32
    return %c0_i32, %c0_i32_0 : i32, i32
  }
  func.func @transform_22(%arg0: i32) -> (i32, i32) {
    %c0_i32 = arith.constant 0 : i32
    %c0_i32_0 = arith.constant 0 : i32
    %c0_i32_1 = arith.constant 0 : i32
    return %c0_i32, %c0_i32_0 : i32, i32
  }
  func.func @transform_23(%arg0: i32) -> (i32, i32) {
    %c0_i32 = arith.constant 0 : i32
    %c0_i32_0 = arith.constant 0 : i32
    %c0_i32_1 = arith.constant 0 : i32
    return %c0_i32, %c0_i32_0 : i32, i32
  }
  func.func @transform_24(%arg0: i32) -> (i32, i32) {
    %c0_i32 = arith.constant 0 : i32
    %c0_i32_0 = arith.constant 0 : i32
    %c0_i32_1 = arith.constant 0 : i32
    return %c0_i32, %c0_i32_0 : i32, i32
  }
}

</mosaic_0001>

<llo_original>
// kernel: tpu_custom_call.1
$region0: #{tpu_custom_call.1}
  #allocation0 [shape = 'u32[]', space=smem, size = 0x4, offset = 0x4, fixed_abs, tag = 'smem constant byte address 0x4 - core index']
  #allocation1 [shape = 'u32[144,128]{1,0:T(1,128)}', space=vmem, size = 0x12000, scoped, tag = 'internal scratch']
  #allocation2 [shape = 'f32[16,4]{1,0:T(8,128)}', space=vmem, size = 0x2000, scoped, tag = 'scratch operand']
  %s0 = inlined_call_operand.vmem [shape: s32[64,1], index: 0, kind: input, shape index: {}]
  %s1 = inlined_call_operand.vmem [shape: bf16[64,4], index: 1, kind: input, shape index: {}]
  %s2 = inlined_call_operand.vmem [shape: bf16[64,4], index: 2, kind: input, shape index: {}]
  %s3 = inlined_call_operand.vmem [shape: bf16[16,4], index: 3, kind: input, shape index: {}]
  %s4 = inlined_call_operand.vmem [shape: bf16[4,128], index: 4, kind: input, shape index: {}]
  %s5 = inlined_call_operand.vmem [shape: bf16[4,128], index: 5, kind: input, shape index: {}]
  %s6 = inlined_call_operand.vmem [shape: f32[1,128], index: 6, kind: input, shape index: {}]
  %s7 = inlined_call_operand.vmem [shape: bf16[128,128], index: 7, kind: input, shape index: {}]
  %s8 = inlined_call_operand.vmem [shape: f32[1,128], index: 8, kind: input, shape index: {}]
  %s9 = inlined_call_operand.vmem [shape: bf16[128,128], index: 9, kind: input, shape index: {}]
  %s10 = inlined_call_operand.vmem [shape: f32[1,128], index: 10, kind: input, shape index: {}]
  %s11 = inlined_call_operand.vmem [shape: bf16[128,4], index: 11, kind: input, shape index: {}]
  %s12 = inlined_call_operand.vmem [shape: f32[1,4], index: 12, kind: input, shape index: {}]
  %s13 = inlined_call_operand.vmem [shape: bf16[4,128], index: 13, kind: input, shape index: {}]
  %s14 = inlined_call_operand.vmem [shape: bf16[4,128], index: 14, kind: input, shape index: {}]
  %s15 = inlined_call_operand.vmem [shape: f32[1,128], index: 15, kind: input, shape index: {}]
  %s16 = inlined_call_operand.vmem [shape: bf16[128,128], index: 16, kind: input, shape index: {}]
  %s17 = inlined_call_operand.vmem [shape: f32[1,128], index: 17, kind: input, shape index: {}]
  %s18 = inlined_call_operand.vmem [shape: bf16[128,128], index: 18, kind: input, shape index: {}]
  %s19 = inlined_call_operand.vmem [shape: f32[1,128], index: 19, kind: input, shape index: {}]
  %s20 = inlined_call_operand.vmem [shape: bf16[128,4], index: 20, kind: input, shape index: {}]
  %s21 = inlined_call_operand.vmem [shape: f32[1,4], index: 21, kind: input, shape index: {}]
  %s22 = inlined_call_operand.vmem [shape: f32[4,2], index: 22, kind: input, shape index: {}]
  %s23 = inlined_call_operand.vmem [shape: f32[1,2], index: 23, kind: input, shape index: {}]
  %s24 = inlined_call_operand.vmem [shape: f32[16,2], index: 24, kind: output, shape index: {}]
  %s25 = sld [smem:[#allocation0]]
  $region137: #{tpu_custom_call.1} parent=0
    _
  %s27 = ssub.s32 1, %s25
  %s28 = scalar_select 0, %s27, %s25
  loop: start=0, step=1, limit=4
  $region2: #{tpu_custom_call.1} parent=0 // loop_pre_header
    _
  $region3: #{tpu_custom_call.1} parent=0 // loop_header
    %s30 = sphi 0, %s34
    %p31 = scmp.ge.s32.totalorder %s30, 4
    %s40 = sphi 0, %s42
    %s43 = sphi 0, %s40
    %s44 = sphi 0, %s43
    %s60 = sphi 0, %s44
    %s66 = sphi 0, %s68
    %s69 = sphi 0, %s66
    %s70 = sphi 0, %s69
    %s86 = sphi 0, %s70
    %s92 = sphi 0, %s94
    %s95 = sphi 0, %s92
    %s96 = sphi 0, %s95
    %s112 = sphi 0, %s96
    %s116 = sphi 0, %s116
    %s118 = sphi 0, %s116
    %s119 = sphi 0, %s118
    %s133 = sphi 0, %s119
    %s137 = sphi 0, %s137
    %s139 = sphi 0, %s137
    %s140 = sphi 0, %s139
    %s154 = sphi 0, %s140
    %s158 = sphi 0, %s158
    %s160 = sphi 0, %s158
    %s161 = sphi 0, %s160
    %s175 = sphi 0, %s161
    %s179 = sphi 0, %s179
    %s181 = sphi 0, %s179
    %s182 = sphi 0, %s181
    %s196 = sphi 0, %s182
    %s200 = sphi 0, %s200
    %s202 = sphi 0, %s200
    %s203 = sphi 0, %s202
    %s217 = sphi 0, %s203
    %s221 = sphi 0, %s221
    %s223 = sphi 0, %s221
    %s224 = sphi 0, %s223
    %s238 = sphi 0, %s224
    %s242 = sphi 0, %s242
    %s244 = sphi 0, %s242
    %s245 = sphi 0, %s244
    %s259 = sphi 0, %s245
    %s263 = sphi 0, %s263
    %s265 = sphi 0, %s263
    %s266 = sphi 0, %s265
    %s280 = sphi 0, %s266
    %s284 = sphi 0, %s284
    %s286 = sphi 0, %s284
    %s287 = sphi 0, %s286
    %s301 = sphi 0, %s287
    %s305 = sphi 0, %s305
    %s307 = sphi 0, %s305
    %s308 = sphi 0, %s307
    %s322 = sphi 0, %s308
    %s326 = sphi 0, %s326
    %s328 = sphi 0, %s326
    %s329 = sphi 0, %s328
    %s343 = sphi 0, %s329
    %s347 = sphi 0, %s347
    %s349 = sphi 0, %s347
    %s350 = sphi 0, %s349
    %s364 = sphi 0, %s350
    %s368 = sphi 0, %s368
    %s370 = sphi 0, %s368
    %s371 = sphi 0, %s370
    %s385 = sphi 0, %s371
    %s389 = sphi 0, %s389
    %s391 = sphi 0, %s389
    %s392 = sphi 0, %s391
    %s406 = sphi 0, %s392
    %s410 = sphi 0, %s410
    %s412 = sphi 0, %s410
    %s413 = sphi 0, %s412
    %s427 = sphi 0, %s413
    %s431 = sphi 0, %s431
    %s433 = sphi 0, %s431
    %s434 = sphi 0, %s433
    %s448 = sphi 0, %s434
    %s452 = sphi 0, %s452
    %s454 = sphi 0, %s452
    %s455 = sphi 0, %s454
    %s469 = sphi 0, %s455
    %s473 = sphi 0, %s473
    %s475 = sphi 0, %s473
    %s476 = sphi 0, %s475
    %s490 = sphi 0, %s476
    %s494 = sphi 0, %s494
    %s496 = sphi 0, %s494
    %s497 = sphi 0, %s496
    %s511 = sphi 0, %s497
    %s515 = sphi 0, %s515
    %s517 = sphi 0, %s515
    %s518 = sphi 0, %s517
    %s532 = sphi 0, %s518
    %s536 = sphi 0, %s536
    %s538 = sphi 0, %s536
    %s539 = sphi 0, %s538
    %s553 = sphi 0, %s539
    %s557 = sphi 0, %s557
    %s559 = sphi 0, %s557
    %s560 = sphi 0, %s559
    %s574 = sphi 0, %s560
  $region4: #{tpu_custom_call.1} parent=0 // loop_header_branch
    %33 = sbr.rel (%p31) target = $region8
  $region5: #{tpu_custom_call.1} parent=0 // loop_body
    %s35 = ssub.s32 %s30, 1
    %s36 = ssub.s32 %s30, 2
    %s37 = sadd.s32 %s30, 1
    %s38 = ssub.s32 %s30, %s37
    %p39 = scmp.eq.s32.totalorder %s38, 0
    %s41 = sadd.s32 %s40, 1
    %s42 = scalar_select %p39, %s40, %s41
    %p45 = pneg %p39
    %p46 = scmp.eq.s32.totalorder %s30, 1
    %p47 = por %p45, %p46
    %p48 = scmp.ne.s32.totalorder %s40, %s43
    %p49 = scmp.eq.s32.totalorder %s30, 0
    %p50 = por %p48, %p49
    %p51 = scmp.ne.s32.totalorder %s40, %s43
    %p52 = scmp.eq.s32.totalorder %s35, 1
    %p53 = por %p51, %p52
    %p54 = scmp.ne.s32.totalorder %s43, %s44
    %p55 = scmp.eq.s32.totalorder %s35, 0
    %p56 = por %p54, %p55
    %p57 = scmp.ne.s32.totalorder %s43, %s44
    %p58 = scmp.eq.s32.totalorder %s36, 1
    %p59 = por %p57, %p58
    %p61 = scmp.ne.s32.totalorder %s44, %s60
    %p62 = scmp.eq.s32.totalorder %s36, 0
    %p63 = por %p61, %p62
    %s64 = ssub.s32 %s30, %s37
    %p65 = scmp.eq.s32.totalorder %s64, 0
    %s67 = sadd.s32 %s66, 1
    %s68 = scalar_select %p65, %s66, %s67
    %p71 = pneg %p65
    %p72 = scmp.eq.s32.totalorder %s30, 1
    %p73 = por %p71, %p72
    %p74 = scmp.ne.s32.totalorder %s66, %s69
    %p75 = scmp.eq.s32.totalorder %s30, 0
    %p76 = por %p74, %p75
    %p77 = scmp.ne.s32.totalorder %s66, %s69
    %p78 = scmp.eq.s32.totalorder %s35, 1
    %p79 = por %p77, %p78
    %p80 = scmp.ne.s32.totalorder %s69, %s70
    %p81 = scmp.eq.s32.totalorder %s35, 0
    %p82 = por %p80, %p81
    %p83 = scmp.ne.s32.totalorder %s69, %s70
    %p84 = scmp.eq.s32.totalorder %s36, 1
    %p85 = por %p83, %p84
    %p87 = scmp.ne.s32.totalorder %s70, %s86
    %p88 = scmp.eq.s32.totalorder %s36, 0
    %p89 = por %p87, %p88
    %s90 = ssub.s32 %s30, %s37
    %p91 = scmp.eq.s32.totalorder %s90, 0
    %s93 = sadd.s32 %s92, 1
    %s94 = scalar_select %p91, %s92, %s93
    %p97 = pneg %p91
    %p98 = scmp.eq.s32.totalorder %s30, 1
    %p99 = por %p97, %p98
    %p100 = scmp.ne.s32.totalorder %s92, %s95
    %p101 = scmp.eq.s32.totalorder %s30, 0
    %p102 = por %p100, %p101
    %p103 = scmp.ne.s32.totalorder %s92, %s95
    %p104 = scmp.eq.s32.totalorder %s35, 1
    %p105 = por %p103, %p104
    %p106 = scmp.ne.s32.totalorder %s95, %s96
    %p107 = scmp.eq.s32.totalorder %s35, 0
    %p108 = por %p106, %p107
    %p109 = scmp.ne.s32.totalorder %s95, %s96
    %p110 = scmp.eq.s32.totalorder %s36, 1
    %p111 = por %p109, %p110
    %p113 = scmp.ne.s32.totalorder %s96, %s112
    %p114 = scmp.eq.s32.totalorder %s36, 0
    %p115 = por %p113, %p114
    %s117 = sadd.s32 %s116, 1
    %p120 = scmp.eq.s32.totalorder %s30, 1
    %p121 = scmp.ne.s32.totalorder %s116, %s118
    %p122 = scmp.eq.s32.totalorder %s30, 0
    %p123 = por %p121, %p122
    %p124 = scmp.ne.s32.totalorder %s116, %s118
    %p125 = scmp.eq.s32.totalorder %s35, 1
    %p126 = por %p124, %p125
    %p127 = scmp.ne.s32.totalorder %s118, %s119
    %p128 = scmp.eq.s32.totalorder %s35, 0
    %p129 = por %p127, %p128
    %p130 = scmp.ne.s32.totalorder %s118, %s119
    %p131 = scmp.eq.s32.totalorder %s36, 1
    %p132 = por %p130, %p131
    %p134 = scmp.ne.s32.totalorder %s119, %s133
    %p135 = scmp.eq.s32.totalorder %s36, 0
    %p136 = por %p134, %p135
    %s138 = sadd.s32 %s137, 1
    %p141 = scmp.eq.s32.totalorder %s30, 1
    %p142 = scmp.ne.s32.totalorder %s137, %s139
    %p143 = scmp.eq.s32.totalorder %s30, 0
    %p144 = por %p142, %p143
    %p145 = scmp.ne.s32.totalorder %s137, %s139
    %p146 = scmp.eq.s32.totalorder %s35, 1
    %p147 = por %p145, %p146
    %p148 = scmp.ne.s32.totalorder %s139, %s140
    %p149 = scmp.eq.s32.totalorder %s35, 0
    %p150 = por %p148, %p149
    %p151 = scmp.ne.s32.totalorder %s139, %s140
    %p152 = scmp.eq.s32.totalorder %s36, 1
    %p153 = por %p151, %p152
    %p155 = scmp.ne.s32.totalorder %s140, %s154
    %p156 = scmp.eq.s32.totalorder %s36, 0
    %p157 = por %p155, %p156
    %s159 = sadd.s32 %s158, 1
    %p162 = scmp.eq.s32.totalorder %s30, 1
    %p163 = scmp.ne.s32.totalorder %s158, %s160
    %p164 = scmp.eq.s32.totalorder %s30, 0
    %p165 = por %p163, %p164
    %p166 = scmp.ne.s32.totalorder %s158, %s160
    %p167 = scmp.eq.s32.totalorder %s35, 1
    %p168 = por %p166, %p167
    %p169 = scmp.ne.s32.totalorder %s160, %s161
    %p170 = scmp.eq.s32.totalorder %s35, 0
    %p171 = por %p169, %p170
    %p172 = scmp.ne.s32.totalorder %s160, %s161
    %p173 = scmp.eq.s32.totalorder %s36, 1
    %p174 = por %p172, %p173
    %p176 = scmp.ne.s32.totalorder %s161, %s175
    %p177 = scmp.eq.s32.totalorder %s36, 0
    %p178 = por %p176, %p177
    %s180 = sadd.s32 %s179, 1
    %p183 = scmp.eq.s32.totalorder %s30, 1
    %p184 = scmp.ne.s32.totalorder %s179, %s181
    %p185 = scmp.eq.s32.totalorder %s30, 0
    %p186 = por %p184, %p185
    %p187 = scmp.ne.s32.totalorder %s179, %s181
    %p188 = scmp.eq.s32.totalorder %s35, 1
    %p189 = por %p187, %p188
    %p190 = scmp.ne.s32.totalorder %s181, %s182
    %p191 = scmp.eq.s32.totalorder %s35, 0
    %p192 = por %p190, %p191
    %p193 = scmp.ne.s32.totalorder %s181, %s182
    %p194 = scmp.eq.s32.totalorder %s36, 1
    %p195 = por %p193, %p194
    %p197 = scmp.ne.s32.totalorder %s182, %s196
    %p198 = scmp.eq.s32.totalorder %s36, 0
    %p199 = por %p197, %p198
    %s201 = sadd.s32 %s200, 1
    %p204 = scmp.eq.s32.totalorder %s30, 1
    %p205 = scmp.ne.s32.totalorder %s200, %s202
    %p206 = scmp.eq.s32.totalorder %s30, 0
    %p207 = por %p205, %p206
    %p208 = scmp.ne.s32.totalorder %s200, %s202
    %p209 = scmp.eq.s32.totalorder %s35, 1
    %p210 = por %p208, %p209
    %p211 = scmp.ne.s32.totalorder %s202, %s203
    %p212 = scmp.eq.s32.totalorder %s35, 0
    %p213 = por %p211, %p212
    %p214 = scmp.ne.s32.totalorder %s202, %s203
    %p215 = scmp.eq.s32.totalorder %s36, 1
    %p216 = por %p214, %p215
    %p218 = scmp.ne.s32.totalorder %s203, %s217
    %p219 = scmp.eq.s32.totalorder %s36, 0
    %p220 = por %p218, %p219
    %s222 = sadd.s32 %s221, 1
    %p225 = scmp.eq.s32.totalorder %s30, 1
    %p226 = scmp.ne.s32.totalorder %s221, %s223
    %p227 = scmp.eq.s32.totalorder %s30, 0
    %p228 = por %p226, %p227
    %p229 = scmp.ne.s32.totalorder %s221, %s223
    %p230 = scmp.eq.s32.totalorder %s35, 1
    %p231 = por %p229, %p230
    %p232 = scmp.ne.s32.totalorder %s223, %s224
    %p233 = scmp.eq.s32.totalorder %s35, 0
    %p234 = por %p232, %p233
    %p235 = scmp.ne.s32.totalorder %s223, %s224
    %p236 = scmp.eq.s32.totalorder %s36, 1
    %p237 = por %p235, %p236
    %p239 = scmp.ne.s32.totalorder %s224, %s238
    %p240 = scmp.eq.s32.totalorder %s36, 0
    %p241 = por %p239, %p240
    %s243 = sadd.s32 %s242, 1
    %p246 = scmp.eq.s32.totalorder %s30, 1
    %p247 = scmp.ne.s32.totalorder %s242, %s244
    %p248 = scmp.eq.s32.totalorder %s30, 0
    %p249 = por %p247, %p248
    %p250 = scmp.ne.s32.totalorder %s242, %s244
    %p251 = scmp.eq.s32.totalorder %s35, 1
    %p252 = por %p250, %p251
    %p253 = scmp.ne.s32.totalorder %s244, %s245
    %p254 = scmp.eq.s32.totalorder %s35, 0
    %p255 = por %p253, %p254
    %p256 = scmp.ne.s32.totalorder %s244, %s245
    %p257 = scmp.eq.s32.totalorder %s36, 1
    %p258 = por %p256, %p257
    %p260 = scmp.ne.s32.totalorder %s245, %s259
    %p261 = scmp.eq.s32.totalorder %s36, 0
    %p262 = por %p260, %p261
    %s264 = sadd.s32 %s263, 1
    %p267 = scmp.eq.s32.totalorder %s30, 1
    %p268 = scmp.ne.s32.totalorder %s263, %s265
    %p269 = scmp.eq.s32.totalorder %s30, 0
    %p270 = por %p268, %p269
    %p271 = scmp.ne.s32.totalorder %s263, %s265
    %p272 = scmp.eq.s32.totalorder %s35, 1
    %p273 = por %p271, %p272
    %p274 = scmp.ne.s32.totalorder %s265, %s266
    %p275 = scmp.eq.s32.totalorder %s35, 0
    %p276 = por %p274, %p275
    %p277 = scmp.ne.s32.totalorder %s265, %s266
    %p278 = scmp.eq.s32.totalorder %s36, 1
    %p279 = por %p277, %p278
    %p281 = scmp.ne.s32.totalorder %s266, %s280
    %p282 = scmp.eq.s32.totalorder %s36, 0
    %p283 = por %p281, %p282
    %s285 = sadd.s32 %s284, 1
    %p288 = scmp.eq.s32.totalorder %s30, 1
    %p289 = scmp.ne.s32.totalorder %s284, %s286
    %p290 = scmp.eq.s32.totalorder %s30, 0
    %p291 = por %p289, %p290
    %p292 = scmp.ne.s32.totalorder %s284, %s286
    %p293 = scmp.eq.s32.totalorder %s35, 1
    %p294 = por %p292, %p293
    %p295 = scmp.ne.s32.totalorder %s286, %s287
    %p296 = scmp.eq.s32.totalorder %s35, 0
    %p297 = por %p295, %p296
    %p298 = scmp.ne.s32.totalorder %s286, %s287
    %p299 = scmp.eq.s32.totalorder %s36, 1
    %p300 = por %p298, %p299
    %p302 = scmp.ne.s32.totalorder %s287, %s301
    %p303 = scmp.eq.s32.totalorder %s36, 0
    %p304 = por %p302, %p303
    %s306 = sadd.s32 %s305, 1
    %p309 = scmp.eq.s32.totalorder %s30, 1
    %p310 = scmp.ne.s32.totalorder %s305, %s307
    %p311 = scmp.eq.s32.totalorder %s30, 0
    %p312 = por %p310, %p311
    %p313 = scmp.ne.s32.totalorder %s305, %s307
    %p314 = scmp.eq.s32.totalorder %s35, 1
    %p315 = por %p313, %p314
    %p316 = scmp.ne.s32.totalorder %s307, %s308
    %p317 = scmp.eq.s32.totalorder %s35, 0
    %p318 = por %p316, %p317
    %p319 = scmp.ne.s32.totalorder %s307, %s308
    %p320 = scmp.eq.s32.totalorder %s36, 1
    %p321 = por %p319, %p320
    %p323 = scmp.ne.s32.totalorder %s308, %s322
    %p324 = scmp.eq.s32.totalorder %s36, 0
    %p325 = por %p323, %p324
    %s327 = sadd.s32 %s326, 1
    %p330 = scmp.eq.s32.totalorder %s30, 1
    %p331 = scmp.ne.s32.totalorder %s326, %s328
    %p332 = scmp.eq.s32.totalorder %s30, 0
    %p333 = por %p331, %p332
    %p334 = scmp.ne.s32.totalorder %s326, %s328
    %p335 = scmp.eq.s32.totalorder %s35, 1
    %p336 = por %p334, %p335
    %p337 = scmp.ne.s32.totalorder %s328, %s329
    %p338 = scmp.eq.s32.totalorder %s35, 0
    %p339 = por %p337, %p338
    %p340 = scmp.ne.s32.totalorder %s328, %s329
    %p341 = scmp.eq.s32.totalorder %s36, 1
    %p342 = por %p340, %p341
    %p344 = scmp.ne.s32.totalorder %s329, %s343
    %p345 = scmp.eq.s32.totalorder %s36, 0
    %p346 = por %p344, %p345
    %s348 = sadd.s32 %s347, 1
    %p351 = scmp.eq.s32.totalorder %s30, 1
    %p352 = scmp.ne.s32.totalorder %s347, %s349
    %p353 = scmp.eq.s32.totalorder %s30, 0
    %p354 = por %p352, %p353
    %p355 = scmp.ne.s32.totalorder %s347, %s349
    %p356 = scmp.eq.s32.totalorder %s35, 1
    %p357 = por %p355, %p356
    %p358 = scmp.ne.s32.totalorder %s349, %s350
    %p359 = scmp.eq.s32.totalorder %s35, 0
    %p360 = por %p358, %p359
    %p361 = scmp.ne.s32.totalorder %s349, %s350
    %p362 = scmp.eq.s32.totalorder %s36, 1
    %p363 = por %p361, %p362
    %p365 = scmp.ne.s32.totalorder %s350, %s364
    %p366 = scmp.eq.s32.totalorder %s36, 0
    %p367 = por %p365, %p366
    %s369 = sadd.s32 %s368, 1
    %p372 = scmp.eq.s32.totalorder %s30, 1
    %p373 = scmp.ne.s32.totalorder %s368, %s370
    %p374 = scmp.eq.s32.totalorder %s30, 0
    %p375 = por %p373, %p374
    %p376 = scmp.ne.s32.totalorder %s368, %s370
    %p377 = scmp.eq.s32.totalorder %s35, 1
    %p378 = por %p376, %p377
    %p379 = scmp.ne.s32.totalorder %s370, %s371
    %p380 = scmp.eq.s32.totalorder %s35, 0
    %p381 = por %p379, %p380
    %p382 = scmp.ne.s32.totalorder %s370, %s371
    %p383 = scmp.eq.s32.totalorder %s36, 1
    %p384 = por %p382, %p383
    %p386 = scmp.ne.s32.totalorder %s371, %s385
    %p387 = scmp.eq.s32.totalorder %s36, 0
    %p388 = por %p386, %p387
    %s390 = sadd.s32 %s389, 1
    %p393 = scmp.eq.s32.totalorder %s30, 1
    %p394 = scmp.ne.s32.totalorder %s389, %s391
    %p395 = scmp.eq.s32.totalorder %s30, 0
    %p396 = por %p394, %p395
    %p397 = scmp.ne.s32.totalorder %s389, %s391
    %p398 = scmp.eq.s32.totalorder %s35, 1
    %p399 = por %p397, %p398
    %p400 = scmp.ne.s32.totalorder %s391, %s392
    %p401 = scmp.eq.s32.totalorder %s35, 0
    %p402 = por %p400, %p401
    %p403 = scmp.ne.s32.totalorder %s391, %s392
    %p404 = scmp.eq.s32.totalorder %s36, 1
    %p405 = por %p403, %p404
    %p407 = scmp.ne.s32.totalorder %s392, %s406
    %p408 = scmp.eq.s32.totalorder %s36, 0
    %p409 = por %p407, %p408
    %s411 = sadd.s32 %s410, 1
    %p414 = scmp.eq.s32.totalorder %s30, 1
    %p415 = scmp.ne.s32.totalorder %s410, %s412
    %p416 = scmp.eq.s32.totalorder %s30, 0
    %p417 = por %p415, %p416
    %p418 = scmp.ne.s32.totalorder %s410, %s412
    %p419 = scmp.eq.s32.totalorder %s35, 1
    %p420 = por %p418, %p419
    %p421 = scmp.ne.s32.totalorder %s412, %s413
    %p422 = scmp.eq.s32.totalorder %s35, 0
    %p423 = por %p421, %p422
    %p424 = scmp.ne.s32.totalorder %s412, %s413
    %p425 = scmp.eq.s32.totalorder %s36, 1
    %p426 = por %p424, %p425
    %p428 = scmp.ne.s32.totalorder %s413, %s427
    %p429 = scmp.eq.s32.totalorder %s36, 0
    %p430 = por %p428, %p429
    %s432 = sadd.s32 %s431, 1
    %p435 = scmp.eq.s32.totalorder %s30, 1
    %p436 = scmp.ne.s32.totalorder %s431, %s433
    %p437 = scmp.eq.s32.totalorder %s30, 0
    %p438 = por %p436, %p437
    %p439 = scmp.ne.s32.totalorder %s431, %s433
    %p440 = scmp.eq.s32.totalorder %s35, 1
    %p441 = por %p439, %p440
    %p442 = scmp.ne.s32.totalorder %s433, %s434
    %p443 = scmp.eq.s32.totalorder %s35, 0
    %p444 = por %p442, %p443
    %p445 = scmp.ne.s32.totalorder %s433, %s434
    %p446 = scmp.eq.s32.totalorder %s36, 1
    %p447 = por %p445, %p446
    %p449 = scmp.ne.s32.totalorder %s434, %s448
    %p450 = scmp.eq.s32.totalorder %s36, 0
    %p451 = por %p449, %p450
    %s453 = sadd.s32 %s452, 1
    %p456 = scmp.eq.s32.totalorder %s30, 1
    %p457 = scmp.ne.s32.totalorder %s452, %s454
    %p458 = scmp.eq.s32.totalorder %s30, 0
    %p459 = por %p457, %p458
    %p460 = scmp.ne.s32.totalorder %s452, %s454
    %p461 = scmp.eq.s32.totalorder %s35, 1
    %p462 = por %p460, %p461
    %p463 = scmp.ne.s32.totalorder %s454, %s455
    %p464 = scmp.eq.s32.totalorder %s35, 0
    %p465 = por %p463, %p464
    %p466 = scmp.ne.s32.totalorder %s454, %s455
    %p467 = scmp.eq.s32.totalorder %s36, 1
    %p468 = por %p466, %p467
    %p470 = scmp.ne.s32.totalorder %s455, %s469
    %p471 = scmp.eq.s32.totalorder %s36, 0
    %p472 = por %p470, %p471
    %s474 = sadd.s32 %s473, 1
    %p477 = scmp.eq.s32.totalorder %s30, 1
    %p478 = scmp.ne.s32.totalorder %s473, %s475
    %p479 = scmp.eq.s32.totalorder %s30, 0
    %p480 = por %p478, %p479
    %p481 = scmp.ne.s32.totalorder %s473, %s475
    %p482 = scmp.eq.s32.totalorder %s35, 1
    %p483 = por %p481, %p482
    %p484 = scmp.ne.s32.totalorder %s475, %s476
    %p485 = scmp.eq.s32.totalorder %s35, 0
    %p486 = por %p484, %p485
    %p487 = scmp.ne.s32.totalorder %s475, %s476
    %p488 = scmp.eq.s32.totalorder %s36, 1
    %p489 = por %p487, %p488
    %p491 = scmp.ne.s32.totalorder %s476, %s490
    %p492 = scmp.eq.s32.totalorder %s36, 0
    %p493 = por %p491, %p492
    %s495 = sadd.s32 %s494, 1
    %p498 = scmp.eq.s32.totalorder %s30, 1
    %p499 = scmp.ne.s32.totalorder %s494, %s496
    %p500 = scmp.eq.s32.totalorder %s30, 0
    %p501 = por %p499, %p500
    %p502 = scmp.ne.s32.totalorder %s494, %s496
    %p503 = scmp.eq.s32.totalorder %s35, 1
    %p504 = por %p502, %p503
    %p505 = scmp.ne.s32.totalorder %s496, %s497
    %p506 = scmp.eq.s32.totalorder %s35, 0
    %p507 = por %p505, %p506
    %p508 = scmp.ne.s32.totalorder %s496, %s497
    %p509 = scmp.eq.s32.totalorder %s36, 1
    %p510 = por %p508, %p509
    %p512 = scmp.ne.s32.totalorder %s497, %s511
    %p513 = scmp.eq.s32.totalorder %s36, 0
    %p514 = por %p512, %p513
    %s516 = sadd.s32 %s515, 1
    %p519 = scmp.eq.s32.totalorder %s30, 1
    %p520 = scmp.ne.s32.totalorder %s515, %s517
    %p521 = scmp.eq.s32.totalorder %s30, 0
    %p522 = por %p520, %p521
    %p523 = scmp.ne.s32.totalorder %s515, %s517
    %p524 = scmp.eq.s32.totalorder %s35, 1
    %p525 = por %p523, %p524
    %p526 = scmp.ne.s32.totalorder %s517, %s518
    %p527 = scmp.eq.s32.totalorder %s35, 0
    %p528 = por %p526, %p527
    %p529 = scmp.ne.s32.totalorder %s517, %s518
    %p530 = scmp.eq.s32.totalorder %s36, 1
    %p531 = por %p529, %p530
    %p533 = scmp.ne.s32.totalorder %s518, %s532
    %p534 = scmp.eq.s32.totalorder %s36, 0
    %p535 = por %p533, %p534
    %s537 = sadd.s32 %s536, 1
    %p540 = scmp.eq.s32.totalorder %s30, 1
    %p541 = scmp.ne.s32.totalorder %s536, %s538
    %p542 = scmp.eq.s32.totalorder %s30, 0
    %p543 = por %p541, %p542
    %p544 = scmp.ne.s32.totalorder %s536, %s538
    %p545 = scmp.eq.s32.totalorder %s35, 1
    %p546 = por %p544, %p545
    %p547 = scmp.ne.s32.totalorder %s538, %s539
    %p548 = scmp.eq.s32.totalorder %s35, 0
    %p549 = por %p547, %p548
    %p550 = scmp.ne.s32.totalorder %s538, %s539
    %p551 = scmp.eq.s32.totalorder %s36, 1
    %p552 = por %p550, %p551
    %p554 = scmp.ne.s32.totalorder %s539, %s553
    %p555 = scmp.eq.s32.totalorder %s36, 0
    %p556 = por %p554, %p555
    %s558 = sadd.s32 %s557, 1
    %p561 = scmp.eq.s32.totalorder %s30, 1
    %p562 = scmp.ne.s32.totalorder %s557, %s559
    %p563 = scmp.eq.s32.totalorder %s30, 0
    %p564 = por %p562, %p563
    %p565 = scmp.ne.s32.totalorder %s557, %s559
    %p566 = scmp.eq.s32.totalorder %s35, 1
    %p567 = por %p565, %p566
    %p568 = scmp.ne.s32.totalorder %s559, %s560
    %p569 = scmp.eq.s32.totalorder %s35, 0
    %p570 = por %p568, %p569
    %p571 = scmp.ne.s32.totalorder %s559, %s560
    %p572 = scmp.eq.s32.totalorder %s36, 1
    %p573 = por %p571, %p572
    %p575 = scmp.ne.s32.totalorder %s560, %s574
    %p576 = scmp.eq.s32.totalorder %s36, 0
    %p577 = por %p575, %p576
    %p578 = scmp.le.s32.totalorder 1, %s30
    %p579 = scmp.lt.s32.totalorder %s30, 3
    %p580 = pnand %p578, %p579
    %p581 = pneg %p580
    // Predicated region
    $region9: #{tpu_custom_call.1} parent=5 // pred_check
      _
    $region10: #{tpu_custom_call.1} parent=5 // pred_check_branch
      %583 = sbr.rel (%p580) target = $region12
    $region11: #{tpu_custom_call.1} parent=5 // pred_region
      %s584 = ssub.s32 %s30, 1
      // Predicated region
      $region13: #{tpu_custom_call.1} parent=11 // pred_check
        %p585 = pneg %p129
      $region14: #{tpu_custom_call.1} parent=11 // pred_check_branch
        %587 = sbr.rel (%p585) target = $region16
      $region15: #{tpu_custom_call.1} parent=11 // pred_region
        _
      $region16: #{tpu_custom_call.1} parent=11 // pred_fallthru
        _
      // Predicated region
      $region17: #{tpu_custom_call.1} parent=11 // pred_check
        %p588 = pneg %p150
      $region18: #{tpu_custom_call.1} parent=11 // pred_check_branch
        %590 = sbr.rel (%p588) target = $region20
      $region19: #{tpu_custom_call.1} parent=11 // pred_region
        _
      $region20: #{tpu_custom_call.1} parent=11 // pred_fallthru
        _
      // Predicated region
      $region21: #{tpu_custom_call.1} parent=11 // pred_check
        %p591 = pneg %p171
      $region22: #{tpu_custom_call.1} parent=11 // pred_check_branch
        %593 = sbr.rel (%p591) target = $region24
      $region23: #{tpu_custom_call.1} parent=11 // pred_region
        _
      $region24: #{tpu_custom_call.1} parent=11 // pred_fallthru
        _
      // Predicated region
      $region25: #{tpu_custom_call.1} parent=11 // pred_check
        %p594 = pneg %p192
      $region26: #{tpu_custom_call.1} parent=11 // pred_check_branch
        %596 = sbr.rel (%p594) target = $region28
      $region27: #{tpu_custom_call.1} parent=11 // pred_region
        _
      $region28: #{tpu_custom_call.1} parent=11 // pred_fallthru
        _
      // Predicated region
      $region29: #{tpu_custom_call.1} parent=11 // pred_check
        %p597 = pneg %p213
      $region30: #{tpu_custom_call.1} parent=11 // pred_check_branch
        %599 = sbr.rel (%p597) target = $region32
      $region31: #{tpu_custom_call.1} parent=11 // pred_region
        _
      $region32: #{tpu_custom_call.1} parent=11 // pred_fallthru
        _
      // Predicated region
      $region33: #{tpu_custom_call.1} parent=11 // pred_check
        %p600 = pneg %p234
      $region34: #{tpu_custom_call.1} parent=11 // pred_check_branch
        %602 = sbr.rel (%p600) target = $region36
      $region35: #{tpu_custom_call.1} parent=11 // pred_region
        _
      $region36: #{tpu_custom_call.1} parent=11 // pred_fallthru
        _
      // Predicated region
      $region37: #{tpu_custom_call.1} parent=11 // pred_check
        %p603 = pneg %p255
      $region38: #{tpu_custom_call.1} parent=11 // pred_check_branch
        %605 = sbr.rel (%p603) target = $region40
      $region39: #{tpu_custom_call.1} parent=11 // pred_region
        _
      $region40: #{tpu_custom_call.1} parent=11 // pred_fallthru
        _
      // Predicated region
      $region41: #{tpu_custom_call.1} parent=11 // pred_check
        %p606 = pneg %p276
      $region42: #{tpu_custom_call.1} parent=11 // pred_check_branch
        %608 = sbr.rel (%p606) target = $region44
      $region43: #{tpu_custom_call.1} parent=11 // pred_region
        _
      $region44: #{tpu_custom_call.1} parent=11 // pred_fallthru
        _
      // Predicated region
      $region45: #{tpu_custom_call.1} parent=11 // pred_check
        %p609 = pneg %p297
      $region46: #{tpu_custom_call.1} parent=11 // pred_check_branch
        %611 = sbr.rel (%p609) target = $region48
      $region47: #{tpu_custom_call.1} parent=11 // pred_region
        _
      $region48: #{tpu_custom_call.1} parent=11 // pred_fallthru
        _
      // Predicated region
      $region49: #{tpu_custom_call.1} parent=11 // pred_check
        %p612 = pneg %p318
      $region50: #{tpu_custom_call.1} parent=11 // pred_check_branch
        %614 = sbr.rel (%p612) target = $region52
      $region51: #{tpu_custom_call.1} parent=11 // pred_region
        _
      $region52: #{tpu_custom_call.1} parent=11 // pred_fallthru
        _
      // Predicated region
      $region53: #{tpu_custom_call.1} parent=11 // pred_check
        %p615 = pneg %p339
      $region54: #{tpu_custom_call.1} parent=11 // pred_check_branch
        %617 = sbr.rel (%p615) target = $region56
      $region55: #{tpu_custom_call.1} parent=11 // pred_region
        _
      $region56: #{tpu_custom_call.1} parent=11 // pred_fallthru
        _
      // Predicated region
      $region57: #{tpu_custom_call.1} parent=11 // pred_check
        %p618 = pneg %p360
      $region58: #{tpu_custom_call.1} parent=11 // pred_check_branch
        %620 = sbr.rel (%p618) target = $region60
      $region59: #{tpu_custom_call.1} parent=11 // pred_region
        _
      $region60: #{tpu_custom_call.1} parent=11 // pred_fallthru
        _
      // Predicated region
      $region61: #{tpu_custom_call.1} parent=11 // pred_check
        %p621 = pneg %p381
      $region62: #{tpu_custom_call.1} parent=11 // pred_check_branch
        %623 = sbr.rel (%p621) target = $region64
      $region63: #{tpu_custom_call.1} parent=11 // pred_region
        _
      $region64: #{tpu_custom_call.1} parent=11 // pred_fallthru
        _
      // Predicated region
      $region65: #{tpu_custom_call.1} parent=11 // pred_check
        %p624 = pneg %p402
      $region66: #{tpu_custom_call.1} parent=11 // pred_check_branch
        %626 = sbr.rel (%p624) target = $region68
      $region67: #{tpu_custom_call.1} parent=11 // pred_region
        _
      $region68: #{tpu_custom_call.1} parent=11 // pred_fallthru
        _
      // Predicated region
      $region69: #{tpu_custom_call.1} parent=11 // pred_check
        %p627 = pneg %p423
      $region70: #{tpu_custom_call.1} parent=11 // pred_check_branch
        %629 = sbr.rel (%p627) target = $region72
      $region71: #{tpu_custom_call.1} parent=11 // pred_region
        _
      $region72: #{tpu_custom_call.1} parent=11 // pred_fallthru
        _
      // Predicated region
      $region73: #{tpu_custom_call.1} parent=11 // pred_check
        %p630 = pneg %p444
      $region74: #{tpu_custom_call.1} parent=11 // pred_check_branch
        %632 = sbr.rel (%p630) target = $region76
      $region75: #{tpu_custom_call.1} parent=11 // pred_region
        _
      $region76: #{tpu_custom_call.1} parent=11 // pred_fallthru
        _
      // Predicated region
      $region77: #{tpu_custom_call.1} parent=11 // pred_check
        %p633 = pneg %p465
      $region78: #{tpu_custom_call.1} parent=11 // pred_check_branch
        %635 = sbr.rel (%p633) target = $region80
      $region79: #{tpu_custom_call.1} parent=11 // pred_region
        _
      $region80: #{tpu_custom_call.1} parent=11 // pred_fallthru
        _
      // Predicated region
      $region81: #{tpu_custom_call.1} parent=11 // pred_check
        %p636 = pneg %p486
      $region82: #{tpu_custom_call.1} parent=11 // pred_check_branch
        %638 = sbr.rel (%p636) target = $region84
      $region83: #{tpu_custom_call.1} parent=11 // pred_region
        _
      $region84: #{tpu_custom_call.1} parent=11 // pred_fallthru
        _
      // Predicated region
      $region85: #{tpu_custom_call.1} parent=11 // pred_check
        %p639 = pneg %p507
      $region86: #{tpu_custom_call.1} parent=11 // pred_check_branch
        %641 = sbr.rel (%p639) target = $region88
      $region87: #{tpu_custom_call.1} parent=11 // pred_region
        _
      $region88: #{tpu_custom_call.1} parent=11 // pred_fallthru
        _
      // Predicated region
      $region89: #{tpu_custom_call.1} parent=11 // pred_check
        %p642 = pneg %p528
      $region90: #{tpu_custom_call.1} parent=11 // pred_check_branch
        %644 = sbr.rel (%p642) target = $region92
      $region91: #{tpu_custom_call.1} parent=11 // pred_region
        _
      $region92: #{tpu_custom_call.1} parent=11 // pred_fallthru
        _
      // Predicated region
      $region93: #{tpu_custom_call.1} parent=11 // pred_check
        %p645 = pneg %p549
      $region94: #{tpu_custom_call.1} parent=11 // pred_check_branch
        %647 = sbr.rel (%p645) target = $region96
      $region95: #{tpu_custom_call.1} parent=11 // pred_region
        _
      $region96: #{tpu_custom_call.1} parent=11 // pred_fallthru
        _
    $region12: #{tpu_custom_call.1} parent=5 // pred_fallthru
      _
    %p648 = scmp.lt.s32.totalorder %s30, 2
    // Predicated region
    $region97: #{tpu_custom_call.1} parent=5 // pred_check
      %p649 = pneg %p648
    $region98: #{tpu_custom_call.1} parent=5 // pred_check_branch
      %651 = sbr.rel (%p649) target = $region100
    $region99: #{tpu_custom_call.1} parent=5 // pred_region
      // Predicated region
      $region101: #{tpu_custom_call.1} parent=99 // pred_check
        %p652 = pneg %p50
      $region102: #{tpu_custom_call.1} parent=99 // pred_check_branch
        %654 = sbr.rel (%p652) target = $region104
      $region103: #{tpu_custom_call.1} parent=99 // pred_region
        %s655 = smul.u32 4, %s30
        %p656 = scmp.lt.s32.totalorder %s655, 7
        %s657 = scalar_select %p656, %s655, 7
        %s658 = smul.addr %s657, 8
        %s659 = scalar_lea.vmem %s0, %s658
        %s660 = smul.u32 4, %s30
      $region104: #{tpu_custom_call.1} parent=99 // pred_fallthru
        _
      // Predicated region
      $region105: #{tpu_custom_call.1} parent=99 // pred_check
        %p661 = pneg %p76
      $region106: #{tpu_custom_call.1} parent=99 // pred_check_branch
        %663 = sbr.rel (%p661) target = $region108
      $region107: #{tpu_custom_call.1} parent=99 // pred_region
        %s664 = smul.u32 4, %s30
        %p665 = scmp.lt.s32.totalorder %s664, 7
        %s666 = scalar_select %p665, %s664, 7
        %s667 = smul.addr %s666, 4
        %s668 = scalar_lea.vmem %s1, %s667
        %s669 = smul.u32 4, %s30
      $region108: #{tpu_custom_call.1} parent=99 // pred_fallthru
        _
      // Predicated region
      $region109: #{tpu_custom_call.1} parent=99 // pred_check
        %p670 = pneg %p102
      $region110: #{tpu_custom_call.1} parent=99 // pred_check_branch
        %672 = sbr.rel (%p670) target = $region112
      $region111: #{tpu_custom_call.1} parent=99 // pred_region
        %s673 = smul.u32 4, %s30
        %p674 = scmp.lt.s32.totalorder %s673, 7
        %s675 = scalar_select %p674, %s673, 7
        %s676 = smul.addr %s675, 4
        %s677 = scalar_lea.vmem %s2, %s676
        %s678 = smul.u32 4, %s30
      $region112: #{tpu_custom_call.1} parent=99 // pred_fallthru
        _
    $region100: #{tpu_custom_call.1} parent=5 // pred_fallthru
      _
    %p679 = scmp.le.s32.totalorder 1, %s30
    %p680 = scmp.lt.s32.totalorder %s30, 3
    %p681 = pnand %p679, %p680
    %p682 = pneg %p681
    // Predicated region
    $region113: #{tpu_custom_call.1} parent=5 // pred_check
      _
    $region114: #{tpu_custom_call.1} parent=5 // pred_check_branch
      %684 = sbr.rel (%p681) target = $region116
    $region115: #{tpu_custom_call.1} parent=5 // pred_region
      %s685 = ssub.s32 %s30, 1
      %s686 = smul.u32 4, %s35
      %p687 = scmp.lt.s32.totalorder %s686, 7
      %s688 = scalar_select %p687, %s686, 7
      %s689 = smul.addr %s688, 8
      %s690 = scalar_lea.vmem %s0, %s689
      %p691 = pneg %p56
      %p692 = pneg %p53
      %s693 = smul.u32 4, %s35
      %p694 = scmp.lt.s32.totalorder %s693, 7
      %s695 = scalar_select %p694, %s693, 7
      %s696 = smul.addr %s695, 4
      %s697 = scalar_lea.vmem %s1, %s696
      %p698 = pneg %p82
      %p699 = pneg %p79
      %s700 = smul.u32 4, %s35
      %p701 = scmp.lt.s32.totalorder %s700, 7
      %s702 = scalar_select %p701, %s700, 7
      %s703 = smul.addr %s702, 4
      %s704 = scalar_lea.vmem %s2, %s703
      %p705 = pneg %p108
      %p706 = pneg %p105
      %p707 = pneg %p129
      %p708 = pneg %p126
      %p709 = pneg %p150
      %p710 = pneg %p147
      %p711 = pneg %p171
      %p712 = pneg %p168
      %p713 = pneg %p192
      %p714 = pneg %p189
      %p715 = pneg %p213
      %p716 = pneg %p210
      %p717 = pneg %p234
      %p718 = pneg %p231
      %p719 = pneg %p255
      %p720 = pneg %p252
      %p721 = pneg %p276
      %p722 = pneg %p273
      %p723 = pneg %p297
      %p724 = pneg %p294
      %p725 = pneg %p318
      %p726 = pneg %p315
      %p727 = pneg %p339
      %p728 = pneg %p336
      %p729 = pneg %p360
      %p730 = pneg %p357
      %p731 = pneg %p381
      %p732 = pneg %p378
      %p733 = pneg %p402
      %p734 = pneg %p399
      %p735 = pneg %p423
      %p736 = pneg %p420
      %p737 = pneg %p444
      %p738 = pneg %p441
      %p739 = pneg %p465
      %p740 = pneg %p462
      %p741 = pneg %p486
      %p742 = pneg %p483
      %p743 = pneg %p507
      %p744 = pneg %p504
      %p745 = pneg %p528
      %p746 = pneg %p525
      %p747 = pneg %p549
      %p748 = pneg %p546
      %p749 = pneg %p570
      %p750 = pneg %p567
      %s751 = smul.u32 4, %s35
      %p752 = scmp.lt.s32.totalorder %s751, 7
      %s753 = scalar_select %p752, %s751, 7
      %s754 = smul.addr %s753, 8
      %s755 = scalar_lea.vmem %s0, %s754
      %s756 = smul.u32 4, %s35
      %s757 = smul.u32 4, %s35
      %p758 = scmp.lt.s32.totalorder %s757, 7
      %s759 = scalar_select %p758, %s757, 7
      %s760 = smul.addr %s759, 4
      %s761 = scalar_lea.vmem %s1, %s760
      %s762 = smul.u32 4, %s35
      %s763 = smul.u32 4, %s35
      %p764 = scmp.lt.s32.totalorder %s763, 7
      %s765 = scalar_select %p764, %s763, 7
      %s766 = smul.addr %s765, 4
      %s767 = scalar_lea.vmem %s2, %s766
      %s768 = smul.u32 4, %s35
      %p770 = scmp.eq.s32.totalorder %s35, 0
      // Predicated region
      $region117: #{tpu_custom_call.1} parent=115 // pred_check
        %p771 = pneg %p770
      $region118: #{tpu_custom_call.1} parent=115 // pred_check_branch
        %773 = sbr.rel (%p771) target = $region120
      $region119: #{tpu_custom_call.1} parent=115 // pred_region
        %vm774 = vcmask 31744
        %775 = vst.msk [vmem:[#allocation2] sm:$0xff] %vm774, 0.0
        %776 = vst.msk [vmem:[#allocation2 + $0x8] sm:$0xff] %vm774, 0.0
      $region120: #{tpu_custom_call.1} parent=115 // pred_fallthru
        _
      %v777 = vld [vmem:[%s761] sm:$0xf]
      %v778 = vld [vmem:[%s761 + $0x4] sm:$0xf]
      %v779 = vld [vmem:[%s761 + $0x8] sm:$0xf]
      %v780 = vld [vmem:[%s761 + $0xc] sm:$0xf]
      %v781 = vld [vmem:[%s4] sm:$0x3]
      %v782 = vld [vmem:[%s767] sm:$0xf]
      %v783 = vld [vmem:[%s767 + $0x4] sm:$0xf]
      %v784 = vld [vmem:[%s767 + $0x8] sm:$0xf]
      %v785 = vld [vmem:[%s767 + $0xc] sm:$0xf]
      %v786 = vld [vmem:[%s5] sm:$0x3]
      %v791 = vunpack.c.l.b16 %v782
      %v792 = vunpack.c.l.b16 %v783
      %v793 = vunpack.c.l.b16 %v784
      %v794 = vunpack.c.l.b16 %v785
      %v795 = vpack.c.b16 %v792, %v791
      %v796 = vpack.c.b16 %v794, %v793
      %vm797 = vcmask 31744
      %v799 = vsel %vm797, %v795, 0
      %v802 = vsel %vm797, %v796, 0
      %vm804 = vcmask 1041408
      %v806 = vsel %vm804, %v786, 0
      %808 = vmatprep.subr.bf16.mxu0 0
      %809 = vmatpush1.bf16.msra.mxu0 %v806
      %810 = vmatprep.subr.bf16.mxu0 0
      %811 = vmatpush1.bf16.msra.mxu0 0
      %812 = vmatprep.subr.bf16.mxu0 0
      %813 = vmatpush1.bf16.msra.mxu0 0
      %814 = vmatprep.subr.bf16.mxu0 0
      %815 = vmatpush1.bf16.msra.mxu0 0
      %816 = vmatprep.subr.bf16.mxu0 0
      %817 = vmatpush1.bf16.msra.mxu0 0
      %818 = vmatprep.subr.bf16.mxu0 0
      %819 = vmatpush1.bf16.msra.mxu0 0
      %820 = vmatprep.subr.bf16.mxu0 0
      %821 = vmatpush1.bf16.msra.mxu0 0
      %822 = vmatprep.subr.bf16.mxu0 0
      %823 = vmatpush1.bf16.msra.mxu0 0
      %824 = vmatprep.subr.bf16.mxu0 0
      %825 = vmatpush1.bf16.msra.mxu0 0
      %826 = vmatprep.subr.bf16.mxu0 0
      %827 = vmatpush1.bf16.msra.mxu0 0
      %828 = vmatprep.subr.bf16.mxu0 0
      %829 = vmatpush1.bf16.msra.mxu0 0
      %830 = vmatprep.subr.bf16.mxu0 0
      %831 = vmatpush1.bf16.msra.mxu0 0
      %832 = vmatprep.subr.bf16.mxu0 0
      %833 = vmatpush1.bf16.msra.mxu0 0
      %834 = vmatprep.subr.bf16.mxu0 0
      %835 = vmatpush1.bf16.msra.mxu0 0
      %836 = vmatprep.subr.bf16.mxu0 0
      %837 = vmatpush1.bf16.msra.mxu0 0
      %838 = vmatprep.subr.bf16.mxu0 0
      %839 = vmatpush1.bf16.msra.mxu0 0
      %840 = vmatprep.mubr.bf16.mxu0 0
      %841 = vmatmul.mubr.bf16.gmra.mrb[0].mxu0 %v799
      %v842 = vpop.f32.mrb[0].mxu0
      %v843 = vadd.f32 0.0, %v842
      %v844 = vpop.f32.mrb[0].mxu0
      %v845 = vpop.f32.mrb[0].mxu0
      %v846 = vadd.f32 0.0, %v845
      %v847 = vpop.f32.mrb[0].mxu0
      %848 = vmatprep.mubr.bf16.mxu0 0
      %849 = vmatmul.mubr.bf16.gmra.mrb[0].mxu0 %v802
      %v850 = vpop.f32.mrb[0].mxu0
      %v851 = vadd.f32 0.0, %v850
      %v852 = vpop.f32.mrb[0].mxu0
      %v853 = vpop.f32.mrb[0].mxu0
      %v854 = vadd.f32 0.0, %v853
      %v855 = vpop.f32.mrb[0].mxu0
      %856 = vdwg.mxu0
      %v861 = vunpack.c.l.b16 %v777
      %v862 = vunpack.c.l.b16 %v778
      %v863 = vunpack.c.l.b16 %v779
      %v864 = vunpack.c.l.b16 %v780
      %v865 = vpack.c.b16 %v862, %v861
      %v866 = vpack.c.b16 %v864, %v863
      %v868 = vsel %vm797, %v865, 0
      %v871 = vsel %vm797, %v866, 0
      %v874 = vsel %vm804, %v781, 0
      %876 = vmatprep.subr.bf16.mxu0 0
      %877 = vmatpush1.bf16.msra.mxu0 %v874
      %878 = vmatprep.subr.bf16.mxu0 0
      %879 = vmatpush1.bf16.msra.mxu0 0
      %880 = vmatprep.subr.bf16.mxu0 0
      %881 = vmatpush1.bf16.msra.mxu0 0
      %882 = vmatprep.subr.bf16.mxu0 0
      %883 = vmatpush1.bf16.msra.mxu0 0
      %884 = vmatprep.subr.bf16.mxu0 0
      %885 = vmatpush1.bf16.msra.mxu0 0
      %886 = vmatprep.subr.bf16.mxu0 0
      %887 = vmatpush1.bf16.msra.mxu0 0
      %888 = vmatprep.subr.bf16.mxu0 0
      %889 = vmatpush1.bf16.msra.mxu0 0
      %890 = vmatprep.subr.bf16.mxu0 0
      %891 = vmatpush1.bf16.msra.mxu0 0
      %892 = vmatprep.subr.bf16.mxu0 0
      %893 = vmatpush1.bf16.msra.mxu0 0
      %894 = vmatprep.subr.bf16.mxu0 0
      %895 = vmatpush1.bf16.msra.mxu0 0
      %896 = vmatprep.subr.bf16.mxu0 0
      %897 = vmatpush1.bf16.msra.mxu0 0
      %898 = vmatprep.subr.bf16.mxu0 0
      %899 = vmatpush1.bf16.msra.mxu0 0
      %900 = vmatprep.subr.bf16.mxu0 0
      %901 = vmatpush1.bf16.msra.mxu0 0
      %902 = vmatprep.subr.bf16.mxu0 0
      %903 = vmatpush1.bf16.msra.mxu0 0
      %904 = vmatprep.subr.bf16.mxu0 0
      %905 = vmatpush1.bf16.msra.mxu0 0
      %906 = vmatprep.subr.bf16.mxu0 0
      %907 = vmatpush1.bf16.msra.mxu0 0
      %908 = vmatprep.mubr.bf16.mxu0 0
      %909 = vmatmul.mubr.bf16.gmra.mrb[0].mxu0 %v868
      %v910 = vpop.f32.mrb[0].mxu0
      %v911 = vadd.f32 %v843, %v910
      %v912 = vpop.f32.mrb[0].mxu0
      %v913 = vpop.f32.mrb[0].mxu0
      %v914 = vadd.f32 %v846, %v913
      %v915 = vpop.f32.mrb[0].mxu0
      %916 = vmatprep.mubr.bf16.mxu0 0
      %917 = vmatmul.mubr.bf16.gmra.mrb[0].mxu0 %v871
      %v918 = vpop.f32.mrb[0].mxu0
      %v919 = vadd.f32 %v851, %v918
      %v920 = vpop.f32.mrb[0].mxu0
      %v921 = vpop.f32.mrb[0].mxu0
      %v922 = vadd.f32 %v854, %v921
      %v923 = vpop.f32.mrb[0].mxu0
      %924 = vdwg.mxu0
      %v925 = vld [vmem:[%s6] sm:$0x1]
      %v927 = vlaneseq
      %v928 = vshrl.u32 %v927, 7
      %v929 = vsub.s32 0, %v928
      %v930 = vrot.slane %v925, %v929
      %v932 = vadd.f32 %v911, %v930
      %v933 = vadd.f32 %v914, %v930
      %v934 = vadd.f32 %v919, %v930
      %v935 = vadd.f32 %v922, %v930
      %v936 = vtanh.pop %v932
      %v937 = vtanh.pop %v933
      %v938 = vtanh.pop %v934
      %v939 = vtanh.pop %v935
      %v940 = vpack.c.bf16 %v937, %v936
      %v941 = vpack.c.bf16 %v939, %v938
      %v942 = vld [vmem:[%s7] sm:$0xf]
      %v943 = vld [vmem:[%s7 + $0x4] sm:$0xf]
      %v944 = vld [vmem:[%s7 + $0x8] sm:$0xf]
      %v945 = vld [vmem:[%s7 + $0xc] sm:$0xf]
      %v946 = vld [vmem:[%s7 + $0x10] sm:$0xf]
      %v947 = vld [vmem:[%s7 + $0x14] sm:$0xf]
      %v948 = vld [vmem:[%s7 + $0x18] sm:$0xf]
      %v949 = vld [vmem:[%s7 + $0x1c] sm:$0xf]
      %v950 = vld [vmem:[%s7 + $0x20] sm:$0xf]
      %v951 = vld [vmem:[%s7 + $0x24] sm:$0xf]
      %v952 = vld [vmem:[%s7 + $0x28] sm:$0xf]
      %v953 = vld [vmem:[%s7 + $0x2c] sm:$0xf]
      %v954 = vld [vmem:[%s7 + $0x30] sm:$0xf]
      %v955 = vld [vmem:[%s7 + $0x34] sm:$0xf]
      %v956 = vld [vmem:[%s7 + $0x38] sm:$0xf]
      %v957 = vld [vmem:[%s7 + $0x3c] sm:$0xf]
      %v958 = vld [vmem:[%s8] sm:$0x1]
      %v960 = vlaneseq
      %v961 = vshrl.u32 %v960, 7
      %v962 = vsub.s32 0, %v961
      %v963 = vrot.slane %v958, %v962
      %v981 = vunpack.c.l.b16 %v942
      %v982 = vunpack.c.l.b16 %v943
      %v983 = vunpack.c.l.b16 %v944
      %v984 = vunpack.c.l.b16 %v945
      %v985 = vunpack.c.l.b16 %v946
      %v986 = vunpack.c.l.b16 %v947
      %v987 = vunpack.c.l.b16 %v948
      %v988 = vunpack.c.l.b16 %v949
      %v989 = vunpack.c.l.b16 %v950
      %v990 = vunpack.c.l.b16 %v951
      %v991 = vunpack.c.l.b16 %v952
      %v992 = vunpack.c.l.b16 %v953
      %v993 = vunpack.c.l.b16 %v954
      %v994 = vunpack.c.l.b16 %v955
      %v995 = vunpack.c.l.b16 %v956
      %v996 = vunpack.c.l.b16 %v957
      %v997 = vpack.c.b16 %v982, %v981
      %v998 = vpack.c.b16 %v984, %v983
      %v999 = vpack.c.b16 %v986, %v985
      %v1000 = vpack.c.b16 %v988, %v987
      %v1001 = vpack.c.b16 %v990, %v989
      %v1002 = vpack.c.b16 %v992, %v991
      %v1003 = vpack.c.b16 %v994, %v993
      %v1004 = vpack.c.b16 %v996, %v995
      %1013 = vmatprep.subr.bf16.mxu0 0
      %1014 = vmatpush1.bf16.msra.mxu0 %v997
      %1015 = vmatprep.subr.bf16.mxu0 0
      %1016 = vmatpush1.bf16.msra.mxu0 %v998
      %1017 = vmatprep.subr.bf16.mxu0 0
      %1018 = vmatpush1.bf16.msra.mxu0 %v999
      %1019 = vmatprep.subr.bf16.mxu0 0
      %1020 = vmatpush1.bf16.msra.mxu0 %v1000
      %1021 = vmatprep.subr.bf16.mxu0 0
      %1022 = vmatpush1.bf16.msra.mxu0 %v1001
      %1023 = vmatprep.subr.bf16.mxu0 0
      %1024 = vmatpush1.bf16.msra.mxu0 %v1002
      %1025 = vmatprep.subr.bf16.mxu0 0
      %1026 = vmatpush1.bf16.msra.mxu0 %v1003
      %1027 = vmatprep.subr.bf16.mxu0 0
      %1028 = vmatpush1.bf16.msra.mxu0 %v1004
      %1029 = vmatprep.subr.bf16.mxu0 0
      %1030 = vmatpush1.bf16.msra.mxu0 0
      %1031 = vmatprep.subr.bf16.mxu0 0
      %1032 = vmatpush1.bf16.msra.mxu0 0
      %1033 = vmatprep.subr.bf16.mxu0 0
      %1034 = vmatpush1.bf16.msra.mxu0 0
      %1035 = vmatprep.subr.bf16.mxu0 0
      %1036 = vmatpush1.bf16.msra.mxu0 0
      %1037 = vmatprep.subr.bf16.mxu0 0
      %1038 = vmatpush1.bf16.msra.mxu0 0
      %1039 = vmatprep.subr.bf16.mxu0 0
      %1040 = vmatpush1.bf16.msra.mxu0 0
      %1041 = vmatprep.subr.bf16.mxu0 0
      %1042 = vmatpush1.bf16.msra.mxu0 0
      %1043 = vmatprep.subr.bf16.mxu0 0
      %1044 = vmatpush1.bf16.msra.mxu0 0
      %1045 = vmatprep.mubr.bf16.mxu0 0
      %1046 = vmatmul.mubr.bf16.gmra.mrb[0].mxu0 %v940
      %v1047 = vpop.f32.mrb[0].mxu0
      %v1048 = vadd.f32 %v963, %v1047
      %v1049 = vpop.f32.mrb[0].mxu0
      %v1050 = vpop.f32.mrb[0].mxu0
      %v1051 = vadd.f32 %v963, %v1050
      %v1052 = vpop.f32.mrb[0].mxu0
      %1053 = vmatprep.mubr.bf16.mxu0 0
      %1054 = vmatmul.mubr.bf16.gmra.mrb[0].mxu0 %v941
      %v1055 = vpop.f32.mrb[0].mxu0
      %v1056 = vadd.f32 %v963, %v1055
      %v1057 = vpop.f32.mrb[0].mxu0
      %v1058 = vpop.f32.mrb[0].mxu0
      %v1059 = vadd.f32 %v963, %v1058
      %v1060 = vpop.f32.mrb[0].mxu0
      %1061 = vdwg.mxu0
      %v1062 = vtanh.pop %v1048
      %v1063 = vtanh.pop %v1051
      %v1064 = vtanh.pop %v1056
      %v1065 = vtanh.pop %v1059
      %v1066 = vpack.c.bf16 %v1063, %v1062
      %v1067 = vpack.c.bf16 %v1065, %v1064
      %v1068 = vld [vmem:[%s9] sm:$0xf]
      %v1069 = vld [vmem:[%s9 + $0x4] sm:$0xf]
      %v1070 = vld [vmem:[%s9 + $0x8] sm:$0xf]
      %v1071 = vld [vmem:[%s9 + $0xc] sm:$0xf]
      %v1072 = vld [vmem:[%s9 + $0x10] sm:$0xf]
      %v1073 = vld [vmem:[%s9 + $0x14] sm:$0xf]
      %v1074 = vld [vmem:[%s9 + $0x18] sm:$0xf]
      %v1075 = vld [vmem:[%s9 + $0x1c] sm:$0xf]
      %v1076 = vld [vmem:[%s9 + $0x20] sm:$0xf]
      %v1077 = vld [vmem:[%s9 + $0x24] sm:$0xf]
      %v1078 = vld [vmem:[%s9 + $0x28] sm:$0xf]
      %v1079 = vld [vmem:[%s9 + $0x2c] sm:$0xf]
      %v1080 = vld [vmem:[%s9 + $0x30] sm:$0xf]
      %v1081 = vld [vmem:[%s9 + $0x34] sm:$0xf]
      %v1082 = vld [vmem:[%s9 + $0x38] sm:$0xf]
      %v1083 = vld [vmem:[%s9 + $0x3c] sm:$0xf]
      %v1084 = vld [vmem:[%s10] sm:$0x1]
      %v1086 = vlaneseq
      %v1087 = vshrl.u32 %v1086, 7
      %v1088 = vsub.s32 0, %v1087
      %v1089 = vrot.slane %v1084, %v1088
      %v1107 = vunpack.c.l.b16 %v1068
      %v1108 = vunpack.c.l.b16 %v1069
      %v1109 = vunpack.c.l.b16 %v1070
      %v1110 = vunpack.c.l.b16 %v1071
      %v1111 = vunpack.c.l.b16 %v1072
      %v1112 = vunpack.c.l.b16 %v1073
      %v1113 = vunpack.c.l.b16 %v1074
      %v1114 = vunpack.c.l.b16 %v1075
      %v1115 = vunpack.c.l.b16 %v1076
      %v1116 = vunpack.c.l.b16 %v1077
      %v1117 = vunpack.c.l.b16 %v1078
      %v1118 = vunpack.c.l.b16 %v1079
      %v1119 = vunpack.c.l.b16 %v1080
      %v1120 = vunpack.c.l.b16 %v1081
      %v1121 = vunpack.c.l.b16 %v1082
      %v1122 = vunpack.c.l.b16 %v1083
      %v1123 = vpack.c.b16 %v1108, %v1107
      %v1124 = vpack.c.b16 %v1110, %v1109
      %v1125 = vpack.c.b16 %v1112, %v1111
      %v1126 = vpack.c.b16 %v1114, %v1113
      %v1127 = vpack.c.b16 %v1116, %v1115
      %v1128 = vpack.c.b16 %v1118, %v1117
      %v1129 = vpack.c.b16 %v1120, %v1119
      %v1130 = vpack.c.b16 %v1122, %v1121
      %1139 = vmatprep.subr.bf16.mxu0 0
      %1140 = vmatpush1.bf16.msra.mxu0 %v1123
      %1141 = vmatprep.subr.bf16.mxu0 0
      %1142 = vmatpush1.bf16.msra.mxu0 %v1124
      %1143 = vmatprep.subr.bf16.mxu0 0
      %1144 = vmatpush1.bf16.msra.mxu0 %v1125
      %1145 = vmatprep.subr.bf16.mxu0 0
      %1146 = vmatpush1.bf16.msra.mxu0 %v1126
      %1147 = vmatprep.subr.bf16.mxu0 0
      %1148 = vmatpush1.bf16.msra.mxu0 %v1127
      %1149 = vmatprep.subr.bf16.mxu0 0
      %1150 = vmatpush1.bf16.msra.mxu0 %v1128
      %1151 = vmatprep.subr.bf16.mxu0 0
      %1152 = vmatpush1.bf16.msra.mxu0 %v1129
      %1153 = vmatprep.subr.bf16.mxu0 0
      %1154 = vmatpush1.bf16.msra.mxu0 %v1130
      %1155 = vmatprep.subr.bf16.mxu0 0
      %1156 = vmatpush1.bf16.msra.mxu0 0
      %1157 = vmatprep.subr.bf16.mxu0 0
      %1158 = vmatpush1.bf16.msra.mxu0 0
      %1159 = vmatprep.subr.bf16.mxu0 0
      %1160 = vmatpush1.bf16.msra.mxu0 0
      %1161 = vmatprep.subr.bf16.mxu0 0
      %1162 = vmatpush1.bf16.msra.mxu0 0
      %1163 = vmatprep.subr.bf16.mxu0 0
      %1164 = vmatpush1.bf16.msra.mxu0 0
      %1165 = vmatprep.subr.bf16.mxu0 0
      %1166 = vmatpush1.bf16.msra.mxu0 0
      %1167 = vmatprep.subr.bf16.mxu0 0
      %1168 = vmatpush1.bf16.msra.mxu0 0
      %1169 = vmatprep.subr.bf16.mxu0 0
      %1170 = vmatpush1.bf16.msra.mxu0 0
      %1171 = vmatprep.mubr.bf16.mxu0 0
      %1172 = vmatmul.mubr.bf16.gmra.mrb[0].mxu0 %v1066
      %v1173 = vpop.f32.mrb[0].mxu0
      %v1174 = vadd.f32 %v1089, %v1173
      %v1175 = vpop.f32.mrb[0].mxu0
      %v1176 = vpop.f32.mrb[0].mxu0
      %v1177 = vadd.f32 %v1089, %v1176
      %v1178 = vpop.f32.mrb[0].mxu0
      %1179 = vmatprep.mubr.bf16.mxu0 0
      %1180 = vmatmul.mubr.bf16.gmra.mrb[0].mxu0 %v1067
      %v1181 = vpop.f32.mrb[0].mxu0
      %v1182 = vadd.f32 %v1089, %v1181
      %v1183 = vpop.f32.mrb[0].mxu0
      %v1184 = vpop.f32.mrb[0].mxu0
      %v1185 = vadd.f32 %v1089, %v1184
      %v1186 = vpop.f32.mrb[0].mxu0
      %1187 = vdwg.mxu0
      %v1188 = vtanh.pop %v1174
      %v1189 = vtanh.pop %v1177
      %v1190 = vtanh.pop %v1182
      %v1191 = vtanh.pop %v1185
      %v1192 = vpack.c.bf16 %v1189, %v1188
      %v1193 = vpack.c.bf16 %v1191, %v1190
      %v1194 = vld [vmem:[%s11] sm:$0xf]
      %v1195 = vld [vmem:[%s11 + $0x4] sm:$0xf]
      %v1196 = vld [vmem:[%s11 + $0x8] sm:$0xf]
      %v1197 = vld [vmem:[%s11 + $0xc] sm:$0xf]
      %v1198 = vld [vmem:[%s11 + $0x10] sm:$0xf]
      %v1199 = vld [vmem:[%s11 + $0x14] sm:$0xf]
      %v1200 = vld [vmem:[%s11 + $0x18] sm:$0xf]
      %v1201 = vld [vmem:[%s11 + $0x1c] sm:$0xf]
      %v1202 = vld [vmem:[%s11 + $0x20] sm:$0xf]
      %v1203 = vld [vmem:[%s11 + $0x24] sm:$0xf]
      %v1204 = vld [vmem:[%s11 + $0x28] sm:$0xf]
      %v1205 = vld [vmem:[%s11 + $0x2c] sm:$0xf]
      %v1206 = vld [vmem:[%s11 + $0x30] sm:$0xf]
      %v1207 = vld [vmem:[%s11 + $0x34] sm:$0xf]
      %v1208 = vld [vmem:[%s11 + $0x38] sm:$0xf]
      %v1209 = vld [vmem:[%s11 + $0x3c] sm:$0xf]
      %v1210 = vld [vmem:[%s12] sm:$0x1]
      %v1212 = vlaneseq
      %v1213 = vshrl.u32 %v1212, 7
      %v1214 = vsub.s32 0, %v1213
      %v1215 = vrot.slane %v1210, %v1214
      %v1233 = vunpack.c.l.b16 %v1194
      %v1234 = vunpack.c.l.b16 %v1195
      %v1235 = vunpack.c.l.b16 %v1196
      %v1236 = vunpack.c.l.b16 %v1197
      %v1237 = vunpack.c.l.b16 %v1198
      %v1238 = vunpack.c.l.b16 %v1199
      %v1239 = vunpack.c.l.b16 %v1200
      %v1240 = vunpack.c.l.b16 %v1201
      %v1241 = vunpack.c.l.b16 %v1202
      %v1242 = vunpack.c.l.b16 %v1203
      %v1243 = vunpack.c.l.b16 %v1204
      %v1244 = vunpack.c.l.b16 %v1205
      %v1245 = vunpack.c.l.b16 %v1206
      %v1246 = vunpack.c.l.b16 %v1207
      %v1247 = vunpack.c.l.b16 %v1208
      %v1248 = vunpack.c.l.b16 %v1209
      %v1249 = vpack.c.b16 %v1234, %v1233
      %v1250 = vpack.c.b16 %v1236, %v1235
      %v1251 = vpack.c.b16 %v1238, %v1237
      %v1252 = vpack.c.b16 %v1240, %v1239
      %v1253 = vpack.c.b16 %v1242, %v1241
      %v1254 = vpack.c.b16 %v1244, %v1243
      %v1255 = vpack.c.b16 %v1246, %v1245
      %v1256 = vpack.c.b16 %v1248, %v1247
      %1265 = vmatprep.subr.bf16.mxu0 0
      %1266 = vmatpush1.bf16.msra.mxu0 %v1249
      %1267 = vmatprep.subr.bf16.mxu0 0
      %1268 = vmatpush1.bf16.msra.mxu0 %v1250
      %1269 = vmatprep.subr.bf16.mxu0 0
      %1270 = vmatpush1.bf16.msra.mxu0 %v1251
      %1271 = vmatprep.subr.bf16.mxu0 0
      %1272 = vmatpush1.bf16.msra.mxu0 %v1252
      %1273 = vmatprep.subr.bf16.mxu0 0
      %1274 = vmatpush1.bf16.msra.mxu0 %v1253
      %1275 = vmatprep.subr.bf16.mxu0 0
      %1276 = vmatpush1.bf16.msra.mxu0 %v1254
      %1277 = vmatprep.subr.bf16.mxu0 0
      %1278 = vmatpush1.bf16.msra.mxu0 %v1255
      %1279 = vmatprep.subr.bf16.mxu0 0
      %1280 = vmatpush1.bf16.msra.mxu0 %v1256
      %1281 = vmatprep.subr.bf16.mxu0 0
      %1282 = vmatpush1.bf16.msra.mxu0 0
      %1283 = vmatprep.subr.bf16.mxu0 0
      %1284 = vmatpush1.bf16.msra.mxu0 0
      %1285 = vmatprep.subr.bf16.mxu0 0
      %1286 = vmatpush1.bf16.msra.mxu0 0
      %1287 = vmatprep.subr.bf16.mxu0 0
      %1288 = vmatpush1.bf16.msra.mxu0 0
      %1289 = vmatprep.subr.bf16.mxu0 0
      %1290 = vmatpush1.bf16.msra.mxu0 0
      %1291 = vmatprep.subr.bf16.mxu0 0
      %1292 = vmatpush1.bf16.msra.mxu0 0
      %1293 = vmatprep.subr.bf16.mxu0 0
      %1294 = vmatpush1.bf16.msra.mxu0 0
      %1295 = vmatprep.subr.bf16.mxu0 0
      %1296 = vmatpush1.bf16.msra.mxu0 0
      %1297 = vmatprep.mubr.bf16.mxu0 0
      %1298 = vmatmul.mubr.bf16.gmra.mrb[0].mxu0 %v1192
      %v1299 = vpop.f32.mrb[0].mxu0
      %v1300 = vadd.f32 %v1215, %v1299
      %v1301 = vpop.f32.mrb[0].mxu0
      %v1302 = vpop.f32.mrb[0].mxu0
      %v1303 = vadd.f32 %v1215, %v1302
      %v1304 = vpop.f32.mrb[0].mxu0
      %1305 = vmatprep.mubr.bf16.mxu0 0
      %1306 = vmatmul.mubr.bf16.gmra.mrb[0].mxu0 %v1193
      %v1307 = vpop.f32.mrb[0].mxu0
      %v1308 = vadd.f32 %v1215, %v1307
      %v1309 = vpop.f32.mrb[0].mxu0
      %v1310 = vpop.f32.mrb[0].mxu0
      %v1311 = vadd.f32 %v1215, %v1310
      %v1312 = vpop.f32.mrb[0].mxu0
      %1313 = vdwg.mxu0
      %v1314 = vtanh.pop %v1300
      %v1315 = vtanh.pop %v1303
      %v1316 = vtanh.pop %v1308
      %v1317 = vtanh.pop %v1311
      %v1318 = vpack.c.bf16 %v1315, %v1314
      %v1319 = vpack.c.bf16 %v1317, %v1316
      %v1320 = vlaneseq
      %v1321 = vand.u32 %v1320, 127
      %v1322 = vld [vmem:[%s755] sm:$0xff]
      %v1323 = vld [vmem:[%s755 + $0x8] sm:$0xff]
      %v1324 = vld [vmem:[%s755 + $0x10] sm:$0xff]
      %v1325 = vld [vmem:[%s755 + $0x18] sm:$0xff]
      %1326 = vset.pattern.permute.xlu0 0
      %1327 = vperm.xlu0 %1326, %v1322
      %v1328 = vpop.permute.xlu0 %1327
      %1329 = vset.pattern.permute.xlu0 0
      %1330 = vperm.xlu0 %1329, %v1323
      %v1331 = vpop.permute.xlu0 %1330
      %1332 = vset.pattern.permute.xlu0 0
      %1333 = vperm.xlu0 %1332, %v1324
      %v1334 = vpop.permute.xlu0 %1333
      %1335 = vset.pattern.permute.xlu0 0
      %1336 = vperm.xlu0 %1335, %v1325
      %v1337 = vpop.permute.xlu0 %1336
      %vm1338 = vcmp.eq.s32.totalorder %v1321, %v1328
      %vm1339 = vcmp.eq.s32.totalorder %v1321, %v1331
      %vm1340 = vcmp.eq.s32.totalorder %v1321, %v1334
      %vm1341 = vcmp.eq.s32.totalorder %v1321, %v1337
      %v1342 = vsel %vm1338, 1, 0
      %v1343 = vsel %vm1339, 1, 0
      %v1344 = vsel %vm1340, 1, 0
      %v1345 = vsel %vm1341, 1, 0
      %v1346 = vcvt.s32.f32 %v1342
      %v1347 = vcvt.s32.f32 %v1343
      %v1348 = vcvt.s32.f32 %v1344
      %v1349 = vcvt.s32.f32 %v1345
      %v1350 = vpack.c.bf16 %v1347, %v1346
      %v1351 = vpack.c.bf16 %v1349, %v1348
      %v1352 = vld [vmem:[#allocation2] sm:$0xff]
      %v1353 = vld [vmem:[#allocation2 + $0x8] sm:$0xff]
      %1354 = vxpose.xlu0.c.b16.start [1/8] %v1350, 128
      %1355 = vxpose.xlu0.c.b16.cont [2/8] %v1351, 128
      %1356 = vxpose.xlu0.c.b16.cont [3/8] 0, 128
      %1357 = vxpose.xlu0.c.b16.cont [4/8] 0, 128
      %1358 = vxpose.xlu0.c.b16.cont [5/8] 0, 128
      %1359 = vxpose.xlu0.c.b16.cont [6/8] 0, 128
      %1360 = vxpose.xlu0.c.b16.cont [7/8] 0, 128
      %1361 = vxpose.xlu0.c.b16.end [8/8] 0, 128
      %v1362 = vpop.trf.xlu0
      %v1363 = vpop.trf.xlu0
      %v1364 = vpop.trf.xlu0
      %v1365 = vpop.trf.xlu0
      %v1366 = vpop.trf.xlu0
      %v1367 = vpop.trf.xlu0
      %v1368 = vpop.trf.xlu0
      %v1369 = vpop.trf.xlu0
      %vm1370 = vcmask 261120
      %v1372 = vsel %vm1370, %v1362, 0
      %1374 = vmatprep.subr.bf16.mxu0 0
      %1375 = vmatpush1.bf16.msra.mxu0 %v1318
      %1376 = vmatprep.subr.bf16.mxu0 0
      %1377 = vmatpush1.bf16.msra.mxu0 %v1319
      %1378 = vmatprep.subr.bf16.mxu0 0
      %1379 = vmatpush1.bf16.msra.mxu0 0
      %1380 = vmatprep.subr.bf16.mxu0 0
      %1381 = vmatpush1.bf16.msra.mxu0 0
      %1382 = vmatprep.subr.bf16.mxu0 0
      %1383 = vmatpush1.bf16.msra.mxu0 0
      %1384 = vmatprep.subr.bf16.mxu0 0
      %1385 = vmatpush1.bf16.msra.mxu0 0
      %1386 = vmatprep.subr.bf16.mxu0 0
      %1387 = vmatpush1.bf16.msra.mxu0 0
      %1388 = vmatprep.subr.bf16.mxu0 0
      %1389 = vmatpush1.bf16.msra.mxu0 0
      %1390 = vmatprep.subr.bf16.mxu0 0
      %1391 = vmatpush1.bf16.msra.mxu0 0
      %1392 = vmatprep.subr.bf16.mxu0 0
      %1393 = vmatpush1.bf16.msra.mxu0 0
      %1394 = vmatprep.subr.bf16.mxu0 0
      %1395 = vmatpush1.bf16.msra.mxu0 0
      %1396 = vmatprep.subr.bf16.mxu0 0
      %1397 = vmatpush1.bf16.msra.mxu0 0
      %1398 = vmatprep.subr.bf16.mxu0 0
      %1399 = vmatpush1.bf16.msra.mxu0 0
      %1400 = vmatprep.subr.bf16.mxu0 0
      %1401 = vmatpush1.bf16.msra.mxu0 0
      %1402 = vmatprep.subr.bf16.mxu0 0
      %1403 = vmatpush1.bf16.msra.mxu0 0
      %1404 = vmatprep.subr.bf16.mxu0 0
      %1405 = vmatpush1.bf16.msra.mxu0 0
      %1406 = vmatprep.mubr.bf16.mxu0 0
      %1407 = vmatmul.mubr.bf16.gmra.mrb[0].mxu0 %v1372
      %v1408 = vpop.f32.mrb[0].mxu0
      %v1409 = vadd.f32 0.0, %v1408
      %v1410 = vpop.f32.mrb[0].mxu0
      %v1411 = vpop.f32.mrb[0].mxu0
      %v1412 = vadd.f32 0.0, %v1411
      %v1413 = vpop.f32.mrb[0].mxu0
      %1414 = vdwg.mxu0
      %v1415 = vadd.f32 %v1352, %v1409
      %v1416 = vadd.f32 %v1353, %v1412
      %1417 = vst.msk [vmem:[#allocation2] sm:$0xff] %vm797, %v1415
      %1418 = vst.msk [vmem:[#allocation2 + $0x8] sm:$0xff] %vm797, %v1416
      %p1419 = scmp.eq.s32.totalorder %s35, 1
      // Predicated region
      $region121: #{tpu_custom_call.1} parent=115 // pred_check
        %p1420 = pneg %p1419
      $region122: #{tpu_custom_call.1} parent=115 // pred_check_branch
        %1422 = sbr.rel (%p1420) target = $region124
      $region123: #{tpu_custom_call.1} parent=115 // pred_region
        %v1423 = vld [vmem:[%s3] sm:$0xf]
        %v1424 = vld [vmem:[%s3 + $0x4] sm:$0xf]
        %v1425 = vld [vmem:[#allocation2] sm:$0xff]
        %v1426 = vld [vmem:[#allocation2 + $0x8] sm:$0xff]
        %v1427 = vpack.c.bf16 %v1426, %v1425
        %v1428 = vld [vmem:[%s13] sm:$0x3]
        %v1429 = vld [vmem:[%s14] sm:$0x3]
        %v1431 = vsel %vm797, %v1427, 0
        %v1434 = vsel %vm804, %v1429, 0
        %1436 = vmatprep.subr.bf16.mxu0 0
        %1437 = vmatpush1.bf16.msra.mxu0 %v1434
        %1438 = vmatprep.subr.bf16.mxu0 0
        %1439 = vmatpush1.bf16.msra.mxu0 0
        %1440 = vmatprep.subr.bf16.mxu0 0
        %1441 = vmatpush1.bf16.msra.mxu0 0
        %1442 = vmatprep.subr.bf16.mxu0 0
        %1443 = vmatpush1.bf16.msra.mxu0 0
        %1444 = vmatprep.subr.bf16.mxu0 0
        %1445 = vmatpush1.bf16.msra.mxu0 0
        %1446 = vmatprep.subr.bf16.mxu0 0
        %1447 = vmatpush1.bf16.msra.mxu0 0
        %1448 = vmatprep.subr.bf16.mxu0 0
        %1449 = vmatpush1.bf16.msra.mxu0 0
        %1450 = vmatprep.subr.bf16.mxu0 0
        %1451 = vmatpush1.bf16.msra.mxu0 0
        %1452 = vmatprep.subr.bf16.mxu0 0
        %1453 = vmatpush1.bf16.msra.mxu0 0
        %1454 = vmatprep.subr.bf16.mxu0 0
        %1455 = vmatpush1.bf16.msra.mxu0 0
        %1456 = vmatprep.subr.bf16.mxu0 0
        %1457 = vmatpush1.bf16.msra.mxu0 0
        %1458 = vmatprep.subr.bf16.mxu0 0
        %1459 = vmatpush1.bf16.msra.mxu0 0
        %1460 = vmatprep.subr.bf16.mxu0 0
        %1461 = vmatpush1.bf16.msra.mxu0 0
        %1462 = vmatprep.subr.bf16.mxu0 0
        %1463 = vmatpush1.bf16.msra.mxu0 0
        %1464 = vmatprep.subr.bf16.mxu0 0
        %1465 = vmatpush1.bf16.msra.mxu0 0
        %1466 = vmatprep.subr.bf16.mxu0 0
        %1467 = vmatpush1.bf16.msra.mxu0 0
        %1468 = vmatprep.mubr.bf16.mxu0 0
        %1469 = vmatmul.mubr.bf16.gmra.mrb[0].mxu0 %v1431
        %v1470 = vpop.f32.mrb[0].mxu0
        %v1471 = vadd.f32 0.0, %v1470
        %v1472 = vpop.f32.mrb[0].mxu0
        %v1473 = vpop.f32.mrb[0].mxu0
        %v1474 = vadd.f32 0.0, %v1473
        %v1475 = vpop.f32.mrb[0].mxu0
        %1476 = vdwg.mxu0
        %v1479 = vunpack.c.l.b16 %v1423
        %v1480 = vunpack.c.l.b16 %v1424
        %v1481 = vpack.c.b16 %v1480, %v1479
        %v1483 = vsel %vm797, %v1481, 0
        %v1486 = vsel %vm804, %v1428, 0
        %1488 = vmatprep.subr.bf16.mxu0 0
        %1489 = vmatpush1.bf16.msra.mxu0 %v1486
        %1490 = vmatprep.subr.bf16.mxu0 0
        %1491 = vmatpush1.bf16.msra.mxu0 0
        %1492 = vmatprep.subr.bf16.mxu0 0
        %1493 = vmatpush1.bf16.msra.mxu0 0
        %1494 = vmatprep.subr.bf16.mxu0 0
        %1495 = vmatpush1.bf16.msra.mxu0 0
        %1496 = vmatprep.subr.bf16.mxu0 0
        %1497 = vmatpush1.bf16.msra.mxu0 0
        %1498 = vmatprep.subr.bf16.mxu0 0
        %1499 = vmatpush1.bf16.msra.mxu0 0
        %1500 = vmatprep.subr.bf16.mxu0 0
        %1501 = vmatpush1.bf16.msra.mxu0 0
        %1502 = vmatprep.subr.bf16.mxu0 0
        %1503 = vmatpush1.bf16.msra.mxu0 0
        %1504 = vmatprep.subr.bf16.mxu0 0
        %1505 = vmatpush1.bf16.msra.mxu0 0
        %1506 = vmatprep.subr.bf16.mxu0 0
        %1507 = vmatpush1.bf16.msra.mxu0 0
        %1508 = vmatprep.subr.bf16.mxu0 0
        %1509 = vmatpush1.bf16.msra.mxu0 0
        %1510 = vmatprep.subr.bf16.mxu0 0
        %1511 = vmatpush1.bf16.msra.mxu0 0
        %1512 = vmatprep.subr.bf16.mxu0 0
        %1513 = vmatpush1.bf16.msra.mxu0 0
        %1514 = vmatprep.subr.bf16.mxu0 0
        %1515 = vmatpush1.bf16.msra.mxu0 0
        %1516 = vmatprep.subr.bf16.mxu0 0
        %1517 = vmatpush1.bf16.msra.mxu0 0
        %1518 = vmatprep.subr.bf16.mxu0 0
        %1519 = vmatpush1.bf16.msra.mxu0 0
        %1520 = vmatprep.mubr.bf16.mxu0 0
        %1521 = vmatmul.mubr.bf16.gmra.mrb[0].mxu0 %v1483
        %v1522 = vpop.f32.mrb[0].mxu0
        %v1523 = vadd.f32 %v1471, %v1522
        %v1524 = vpop.f32.mrb[0].mxu0
        %v1525 = vpop.f32.mrb[0].mxu0
        %v1526 = vadd.f32 %v1474, %v1525
        %v1527 = vpop.f32.mrb[0].mxu0
        %1528 = vdwg.mxu0
        %v1529 = vld [vmem:[%s15] sm:$0x1]
        %v1531 = vlaneseq
        %v1532 = vshrl.u32 %v1531, 7
        %v1533 = vsub.s32 0, %v1532
        %v1534 = vrot.slane %v1529, %v1533
        %v1536 = vadd.f32 %v1523, %v1534
        %v1537 = vadd.f32 %v1526, %v1534
        %v1538 = vtanh.pop %v1536
        %v1539 = vtanh.pop %v1537
        %v1540 = vpack.c.bf16 %v1539, %v1538
        %v1541 = vld [vmem:[%s16] sm:$0xf]
        %v1542 = vld [vmem:[%s16 + $0x4] sm:$0xf]
        %v1543 = vld [vmem:[%s16 + $0x8] sm:$0xf]
        %v1544 = vld [vmem:[%s16 + $0xc] sm:$0xf]
        %v1545 = vld [vmem:[%s16 + $0x10] sm:$0xf]
        %v1546 = vld [vmem:[%s16 + $0x14] sm:$0xf]
        %v1547 = vld [vmem:[%s16 + $0x18] sm:$0xf]
        %v1548 = vld [vmem:[%s16 + $0x1c] sm:$0xf]
        %v1549 = vld [vmem:[%s16 + $0x20] sm:$0xf]
        %v1550 = vld [vmem:[%s16 + $0x24] sm:$0xf]
        %v1551 = vld [vmem:[%s16 + $0x28] sm:$0xf]
        %v1552 = vld [vmem:[%s16 + $0x2c] sm:$0xf]
        %v1553 = vld [vmem:[%s16 + $0x30] sm:$0xf]
        %v1554 = vld [vmem:[%s16 + $0x34] sm:$0xf]
        %v1555 = vld [vmem:[%s16 + $0x38] sm:$0xf]
        %v1556 = vld [vmem:[%s16 + $0x3c] sm:$0xf]
        %v1557 = vld [vmem:[%s17] sm:$0x1]
        %v1559 = vlaneseq
        %v1560 = vshrl.u32 %v1559, 7
        %v1561 = vsub.s32 0, %v1560
        %v1562 = vrot.slane %v1557, %v1561
        %v1580 = vunpack.c.l.b16 %v1541
        %v1581 = vunpack.c.l.b16 %v1542
        %v1582 = vunpack.c.l.b16 %v1543
        %v1583 = vunpack.c.l.b16 %v1544
        %v1584 = vunpack.c.l.b16 %v1545
        %v1585 = vunpack.c.l.b16 %v1546
        %v1586 = vunpack.c.l.b16 %v1547
        %v1587 = vunpack.c.l.b16 %v1548
        %v1588 = vunpack.c.l.b16 %v1549
        %v1589 = vunpack.c.l.b16 %v1550
        %v1590 = vunpack.c.l.b16 %v1551
        %v1591 = vunpack.c.l.b16 %v1552
        %v1592 = vunpack.c.l.b16 %v1553
        %v1593 = vunpack.c.l.b16 %v1554
        %v1594 = vunpack.c.l.b16 %v1555
        %v1595 = vunpack.c.l.b16 %v1556
        %v1596 = vpack.c.b16 %v1581, %v1580
        %v1597 = vpack.c.b16 %v1583, %v1582
        %v1598 = vpack.c.b16 %v1585, %v1584
        %v1599 = vpack.c.b16 %v1587, %v1586
        %v1600 = vpack.c.b16 %v1589, %v1588
        %v1601 = vpack.c.b16 %v1591, %v1590
        %v1602 = vpack.c.b16 %v1593, %v1592
        %v1603 = vpack.c.b16 %v1595, %v1594
        %1612 = vmatprep.subr.bf16.mxu0 0
        %1613 = vmatpush1.bf16.msra.mxu0 %v1596
        %1614 = vmatprep.subr.bf16.mxu0 0
        %1615 = vmatpush1.bf16.msra.mxu0 %v1597
        %1616 = vmatprep.subr.bf16.mxu0 0
        %1617 = vmatpush1.bf16.msra.mxu0 %v1598
        %1618 = vmatprep.subr.bf16.mxu0 0
        %1619 = vmatpush1.bf16.msra.mxu0 %v1599
        %1620 = vmatprep.subr.bf16.mxu0 0
        %1621 = vmatpush1.bf16.msra.mxu0 %v1600
        %1622 = vmatprep.subr.bf16.mxu0 0
        %1623 = vmatpush1.bf16.msra.mxu0 %v1601
        %1624 = vmatprep.subr.bf16.mxu0 0
        %1625 = vmatpush1.bf16.msra.mxu0 %v1602
        %1626 = vmatprep.subr.bf16.mxu0 0
        %1627 = vmatpush1.bf16.msra.mxu0 %v1603
        %1628 = vmatprep.subr.bf16.mxu0 0
        %1629 = vmatpush1.bf16.msra.mxu0 0
        %1630 = vmatprep.subr.bf16.mxu0 0
        %1631 = vmatpush1.bf16.msra.mxu0 0
        %1632 = vmatprep.subr.bf16.mxu0 0
        %1633 = vmatpush1.bf16.msra.mxu0 0
        %1634 = vmatprep.subr.bf16.mxu0 0
        %1635 = vmatpush1.bf16.msra.mxu0 0
        %1636 = vmatprep.subr.bf16.mxu0 0
        %1637 = vmatpush1.bf16.msra.mxu0 0
        %1638 = vmatprep.subr.bf16.mxu0 0
        %1639 = vmatpush1.bf16.msra.mxu0 0
        %1640 = vmatprep.subr.bf16.mxu0 0
        %1641 = vmatpush1.bf16.msra.mxu0 0
        %1642 = vmatprep.subr.bf16.mxu0 0
        %1643 = vmatpush1.bf16.msra.mxu0 0
        %1644 = vmatprep.mubr.bf16.mxu0 0
        %1645 = vmatmul.mubr.bf16.gmra.mrb[0].mxu0 %v1540
        %v1646 = vpop.f32.mrb[0].mxu0
        %v1647 = vadd.f32 %v1562, %v1646
        %v1648 = vpop.f32.mrb[0].mxu0
        %v1649 = vpop.f32.mrb[0].mxu0
        %v1650 = vadd.f32 %v1562, %v1649
        %v1651 = vpop.f32.mrb[0].mxu0
        %1652 = vdwg.mxu0
        %v1653 = vtanh.pop %v1647
        %v1654 = vtanh.pop %v1650
        %v1655 = vpack.c.bf16 %v1654, %v1653
        %v1656 = vld [vmem:[%s18] sm:$0xf]
        %v1657 = vld [vmem:[%s18 + $0x4] sm:$0xf]
        %v1658 = vld [vmem:[%s18 + $0x8] sm:$0xf]
        %v1659 = vld [vmem:[%s18 + $0xc] sm:$0xf]
        %v1660 = vld [vmem:[%s18 + $0x10] sm:$0xf]
        %v1661 = vld [vmem:[%s18 + $0x14] sm:$0xf]
        %v1662 = vld [vmem:[%s18 + $0x18] sm:$0xf]
        %v1663 = vld [vmem:[%s18 + $0x1c] sm:$0xf]
        %v1664 = vld [vmem:[%s18 + $0x20] sm:$0xf]
        %v1665 = vld [vmem:[%s18 + $0x24] sm:$0xf]
        %v1666 = vld [vmem:[%s18 + $0x28] sm:$0xf]
        %v1667 = vld [vmem:[%s18 + $0x2c] sm:$0xf]
        %v1668 = vld [vmem:[%s18 + $0x30] sm:$0xf]
        %v1669 = vld [vmem:[%s18 + $0x34] sm:$0xf]
        %v1670 = vld [vmem:[%s18 + $0x38] sm:$0xf]
        %v1671 = vld [vmem:[%s18 + $0x3c] sm:$0xf]
        %v1672 = vld [vmem:[%s19] sm:$0x1]
        %v1674 = vlaneseq
        %v1675 = vshrl.u32 %v1674, 7
        %v1676 = vsub.s32 0, %v1675
        %v1677 = vrot.slane %v1672, %v1676
        %v1695 = vunpack.c.l.b16 %v1656
        %v1696 = vunpack.c.l.b16 %v1657
        %v1697 = vunpack.c.l.b16 %v1658
        %v1698 = vunpack.c.l.b16 %v1659
        %v1699 = vunpack.c.l.b16 %v1660
        %v1700 = vunpack.c.l.b16 %v1661
        %v1701 = vunpack.c.l.b16 %v1662
        %v1702 = vunpack.c.l.b16 %v1663
        %v1703 = vunpack.c.l.b16 %v1664
        %v1704 = vunpack.c.l.b16 %v1665
        %v1705 = vunpack.c.l.b16 %v1666
        %v1706 = vunpack.c.l.b16 %v1667
        %v1707 = vunpack.c.l.b16 %v1668
        %v1708 = vunpack.c.l.b16 %v1669
        %v1709 = vunpack.c.l.b16 %v1670
        %v1710 = vunpack.c.l.b16 %v1671
        %v1711 = vpack.c.b16 %v1696, %v1695
        %v1712 = vpack.c.b16 %v1698, %v1697
        %v1713 = vpack.c.b16 %v1700, %v1699
        %v1714 = vpack.c.b16 %v1702, %v1701
        %v1715 = vpack.c.b16 %v1704, %v1703
        %v1716 = vpack.c.b16 %v1706, %v1705
        %v1717 = vpack.c.b16 %v1708, %v1707
        %v1718 = vpack.c.b16 %v1710, %v1709
        %1727 = vmatprep.subr.bf16.mxu0 0
        %1728 = vmatpush1.bf16.msra.mxu0 %v1711
        %1729 = vmatprep.subr.bf16.mxu0 0
        %1730 = vmatpush1.bf16.msra.mxu0 %v1712
        %1731 = vmatprep.subr.bf16.mxu0 0
        %1732 = vmatpush1.bf16.msra.mxu0 %v1713
        %1733 = vmatprep.subr.bf16.mxu0 0
        %1734 = vmatpush1.bf16.msra.mxu0 %v1714
        %1735 = vmatprep.subr.bf16.mxu0 0
        %1736 = vmatpush1.bf16.msra.mxu0 %v1715
        %1737 = vmatprep.subr.bf16.mxu0 0
        %1738 = vmatpush1.bf16.msra.mxu0 %v1716
        %1739 = vmatprep.subr.bf16.mxu0 0
        %1740 = vmatpush1.bf16.msra.mxu0 %v1717
        %1741 = vmatprep.subr.bf16.mxu0 0
        %1742 = vmatpush1.bf16.msra.mxu0 %v1718
        %1743 = vmatprep.subr.bf16.mxu0 0
        %1744 = vmatpush1.bf16.msra.mxu0 0
        %1745 = vmatprep.subr.bf16.mxu0 0
        %1746 = vmatpush1.bf16.msra.mxu0 0
        %1747 = vmatprep.subr.bf16.mxu0 0
        %1748 = vmatpush1.bf16.msra.mxu0 0
        %1749 = vmatprep.subr.bf16.mxu0 0
        %1750 = vmatpush1.bf16.msra.mxu0 0
        %1751 = vmatprep.subr.bf16.mxu0 0
        %1752 = vmatpush1.bf16.msra.mxu0 0
        %1753 = vmatprep.subr.bf16.mxu0 0
        %1754 = vmatpush1.bf16.msra.mxu0 0
        %1755 = vmatprep.subr.bf16.mxu0 0
        %1756 = vmatpush1.bf16.msra.mxu0 0
        %1757 = vmatprep.subr.bf16.mxu0 0
        %1758 = vmatpush1.bf16.msra.mxu0 0
        %1759 = vmatprep.mubr.bf16.mxu0 0
        %1760 = vmatmul.mubr.bf16.gmra.mrb[0].mxu0 %v1655
        %v1761 = vpop.f32.mrb[0].mxu0
        %v1762 = vadd.f32 %v1677, %v1761
        %v1763 = vpop.f32.mrb[0].mxu0
        %v1764 = vpop.f32.mrb[0].mxu0
        %v1765 = vadd.f32 %v1677, %v1764
        %v1766 = vpop.f32.mrb[0].mxu0
        %1767 = vdwg.mxu0
        %v1768 = vtanh.pop %v1762
        %v1769 = vtanh.pop %v1765
        %v1770 = vpack.c.bf16 %v1769, %v1768
        %v1771 = vld [vmem:[%s20] sm:$0xf]
        %v1772 = vld [vmem:[%s20 + $0x4] sm:$0xf]
        %v1773 = vld [vmem:[%s20 + $0x8] sm:$0xf]
        %v1774 = vld [vmem:[%s20 + $0xc] sm:$0xf]
        %v1775 = vld [vmem:[%s20 + $0x10] sm:$0xf]
        %v1776 = vld [vmem:[%s20 + $0x14] sm:$0xf]
        %v1777 = vld [vmem:[%s20 + $0x18] sm:$0xf]
        %v1778 = vld [vmem:[%s20 + $0x1c] sm:$0xf]
        %v1779 = vld [vmem:[%s20 + $0x20] sm:$0xf]
        %v1780 = vld [vmem:[%s20 + $0x24] sm:$0xf]
        %v1781 = vld [vmem:[%s20 + $0x28] sm:$0xf]
        %v1782 = vld [vmem:[%s20 + $0x2c] sm:$0xf]
        %v1783 = vld [vmem:[%s20 + $0x30] sm:$0xf]
        %v1784 = vld [vmem:[%s20 + $0x34] sm:$0xf]
        %v1785 = vld [vmem:[%s20 + $0x38] sm:$0xf]
        %v1786 = vld [vmem:[%s20 + $0x3c] sm:$0xf]
        %v1787 = vld [vmem:[%s21] sm:$0x1]
        %v1789 = vlaneseq
        %v1790 = vshrl.u32 %v1789, 7
        %v1791 = vsub.s32 0, %v1790
        %v1792 = vrot.slane %v1787, %v1791
        %v1810 = vunpack.c.l.b16 %v1771
        %v1811 = vunpack.c.l.b16 %v1772
        %v1812 = vunpack.c.l.b16 %v1773
        %v1813 = vunpack.c.l.b16 %v1774
        %v1814 = vunpack.c.l.b16 %v1775
        %v1815 = vunpack.c.l.b16 %v1776
        %v1816 = vunpack.c.l.b16 %v1777
        %v1817 = vunpack.c.l.b16 %v1778
        %v1818 = vunpack.c.l.b16 %v1779
        %v1819 = vunpack.c.l.b16 %v1780
        %v1820 = vunpack.c.l.b16 %v1781
        %v1821 = vunpack.c.l.b16 %v1782
        %v1822 = vunpack.c.l.b16 %v1783
        %v1823 = vunpack.c.l.b16 %v1784
        %v1824 = vunpack.c.l.b16 %v1785
        %v1825 = vunpack.c.l.b16 %v1786
        %v1826 = vpack.c.b16 %v1811, %v1810
        %v1827 = vpack.c.b16 %v1813, %v1812
        %v1828 = vpack.c.b16 %v1815, %v1814
        %v1829 = vpack.c.b16 %v1817, %v1816
        %v1830 = vpack.c.b16 %v1819, %v1818
        %v1831 = vpack.c.b16 %v1821, %v1820
        %v1832 = vpack.c.b16 %v1823, %v1822
        %v1833 = vpack.c.b16 %v1825, %v1824
        %1842 = vmatprep.subr.bf16.mxu0 0
        %1843 = vmatpush1.bf16.msra.mxu0 %v1826
        %1844 = vmatprep.subr.bf16.mxu0 0
        %1845 = vmatpush1.bf16.msra.mxu0 %v1827
        %1846 = vmatprep.subr.bf16.mxu0 0
        %1847 = vmatpush1.bf16.msra.mxu0 %v1828
        %1848 = vmatprep.subr.bf16.mxu0 0
        %1849 = vmatpush1.bf16.msra.mxu0 %v1829
        %1850 = vmatprep.subr.bf16.mxu0 0
        %1851 = vmatpush1.bf16.msra.mxu0 %v1830
        %1852 = vmatprep.subr.bf16.mxu0 0
        %1853 = vmatpush1.bf16.msra.mxu0 %v1831
        %1854 = vmatprep.subr.bf16.mxu0 0
        %1855 = vmatpush1.bf16.msra.mxu0 %v1832
        %1856 = vmatprep.subr.bf16.mxu0 0
        %1857 = vmatpush1.bf16.msra.mxu0 %v1833
        %1858 = vmatprep.subr.bf16.mxu0 0
        %1859 = vmatpush1.bf16.msra.mxu0 0
        %1860 = vmatprep.subr.bf16.mxu0 0
        %1861 = vmatpush1.bf16.msra.mxu0 0
        %1862 = vmatprep.subr.bf16.mxu0 0
        %1863 = vmatpush1.bf16.msra.mxu0 0
        %1864 = vmatprep.subr.bf16.mxu0 0
        %1865 = vmatpush1.bf16.msra.mxu0 0
        %1866 = vmatprep.subr.bf16.mxu0 0
        %1867 = vmatpush1.bf16.msra.mxu0 0
        %1868 = vmatprep.subr.bf16.mxu0 0
        %1869 = vmatpush1.bf16.msra.mxu0 0
        %1870 = vmatprep.subr.bf16.mxu0 0
        %1871 = vmatpush1.bf16.msra.mxu0 0
        %1872 = vmatprep.subr.bf16.mxu0 0
        %1873 = vmatpush1.bf16.msra.mxu0 0
        %1874 = vmatprep.mubr.bf16.mxu0 0
        %1875 = vmatmul.mubr.bf16.gmra.mrb[0].mxu0 %v1770
        %v1876 = vpop.f32.mrb[0].mxu0
        %v1877 = vadd.f32 %v1792, %v1876
        %v1878 = vpop.f32.mrb[0].mxu0
        %v1879 = vpop.f32.mrb[0].mxu0
        %v1880 = vadd.f32 %v1792, %v1879
        %v1881 = vpop.f32.mrb[0].mxu0
        %1882 = vdwg.mxu0
        %v1883 = vtanh.pop %v1877
        %v1884 = vtanh.pop %v1880
        %v1885 = vld [vmem:[%s22] sm:$0xf]
        %v1886 = vld [vmem:[%s23] sm:$0x1]
        %v1888 = vlaneseq
        %v1889 = vshrl.u32 %v1888, 7
        %v1890 = vsub.s32 0, %v1889
        %v1891 = vrot.slane %v1886, %v1890
        %v1894 = vsel %vm797, %v1883, 0
        %v1897 = vsel %vm797, %v1884, 0
        %vm1899 = vcmask 1043456
        %v1901 = vsel %vm1899, %v1885, 0
        %1903 = vmatprep.subr.mxu0 0.0
        %1904 = vmatpush1.msra.mxu0 %v1901
        %1905 = vmatprep.subr.mxu0 0.0
        %1906 = vmatpush1.msra.mxu0 0.0
        %1907 = vmatprep.subr.mxu0 0.0
        %1908 = vmatpush1.msra.mxu0 0.0
        %1909 = vmatprep.subr.mxu0 0.0
        %1910 = vmatpush1.msra.mxu0 0.0
        %1911 = vmatprep.subr.mxu0 0.0
        %1912 = vmatpush1.msra.mxu0 0.0
        %1913 = vmatprep.subr.mxu0 0.0
        %1914 = vmatpush1.msra.mxu0 0.0
        %1915 = vmatprep.subr.mxu0 0.0
        %1916 = vmatpush1.msra.mxu0 0.0
        %1917 = vmatprep.subr.mxu0 0.0
        %1918 = vmatpush1.msra.mxu0 0.0
        %1919 = vmatprep.subr.mxu0 0.0
        %1920 = vmatpush1.msra.mxu0 0.0
        %1921 = vmatprep.subr.mxu0 0.0
        %1922 = vmatpush1.msra.mxu0 0.0
        %1923 = vmatprep.subr.mxu0 0.0
        %1924 = vmatpush1.msra.mxu0 0.0
        %1925 = vmatprep.subr.mxu0 0.0
        %1926 = vmatpush1.msra.mxu0 0.0
        %1927 = vmatprep.subr.mxu0 0.0
        %1928 = vmatpush1.msra.mxu0 0.0
        %1929 = vmatprep.subr.mxu0 0.0
        %1930 = vmatpush1.msra.mxu0 0.0
        %1931 = vmatprep.subr.mxu0 0.0
        %1932 = vmatpush1.msra.mxu0 0.0
        %1933 = vmatprep.subr.mxu0 0.0
        %1934 = vmatpush1.msra.mxu0 0.0
        %1935 = vmatprep.subr.mxu0 0.0
        %1936 = vmatpush1.msra.mxu0 0.0
        %1937 = vmatprep.subr.mxu0 0.0
        %1938 = vmatpush1.msra.mxu0 0.0
        %1939 = vmatprep.subr.mxu0 0.0
        %1940 = vmatpush1.msra.mxu0 0.0
        %1941 = vmatprep.subr.mxu0 0.0
        %1942 = vmatpush1.msra.mxu0 0.0
        %1943 = vmatprep.subr.mxu0 0.0
        %1944 = vmatpush1.msra.mxu0 0.0
        %1945 = vmatprep.subr.mxu0 0.0
        %1946 = vmatpush1.msra.mxu0 0.0
        %1947 = vmatprep.subr.mxu0 0.0
        %1948 = vmatpush1.msra.mxu0 0.0
        %1949 = vmatprep.subr.mxu0 0.0
        %1950 = vmatpush1.msra.mxu0 0.0
        %1951 = vmatprep.subr.mxu0 0.0
        %1952 = vmatpush1.msra.mxu0 0.0
        %1953 = vmatprep.subr.mxu0 0.0
        %1954 = vmatpush1.msra.mxu0 0.0
        %1955 = vmatprep.subr.mxu0 0.0
        %1956 = vmatpush1.msra.mxu0 0.0
        %1957 = vmatprep.subr.mxu0 0.0
        %1958 = vmatpush1.msra.mxu0 0.0
        %1959 = vmatprep.subr.mxu0 0.0
        %1960 = vmatpush1.msra.mxu0 0.0
        %1961 = vmatprep.subr.mxu0 0.0
        %1962 = vmatpush1.msra.mxu0 0.0
        %1963 = vmatprep.subr.mxu0 0.0
        %1964 = vmatpush1.msra.mxu0 0.0
        %1965 = vmatprep.subr.mxu0 0.0
        %1966 = vmatpush1.msra.mxu0 0.0
        %1967 = vmatprep.mubr.f32.mxu0 0.0
        %1968 = vmatmul.mubr.f32.gmra.mrb[0].mxu0 %v1894
        %v1969 = vpop.f32.mrb[0].mxu0
        %v1970 = vadd.f32 %v1891, %v1969
        %v1971 = vpop.f32.mrb[0].mxu0
        %1972 = vmatprep.mubr.f32.mxu0 0.0
        %1973 = vmatmul.mubr.f32.gmra.mrb[0].mxu0 %v1897
        %v1974 = vpop.f32.mrb[0].mxu0
        %v1975 = vadd.f32 %v1891, %v1974
        %v1976 = vpop.f32.mrb[0].mxu0
        %1977 = vdwg.mxu0
        %vm1978 = vcmask 15360
        %1979 = vst.msk [vmem:[%s24] sm:$0xff] %vm1978, %v1970
        %1980 = vst.msk [vmem:[%s24 + $0x8] sm:$0xff] %vm1978, %v1975
      $region124: #{tpu_custom_call.1} parent=115 // pred_fallthru
        _
      // Predicated region
      $region125: #{tpu_custom_call.1} parent=115 // pred_check
        %p1981 = pneg %p567
      $region126: #{tpu_custom_call.1} parent=115 // pred_check_branch
        %1983 = sbr.rel (%p1981) target = $region128
      $region127: #{tpu_custom_call.1} parent=115 // pred_region
        _
      $region128: #{tpu_custom_call.1} parent=115 // pred_fallthru
        _
      // Predicated region
      $region129: #{tpu_custom_call.1} parent=115 // pred_check
        %p1984 = pneg %p567
      $region130: #{tpu_custom_call.1} parent=115 // pred_check_branch
        %1986 = sbr.rel (%p1984) target = $region132
      $region131: #{tpu_custom_call.1} parent=115 // pred_region
        _
      $region132: #{tpu_custom_call.1} parent=115 // pred_fallthru
        _
    $region116: #{tpu_custom_call.1} parent=5 // pred_fallthru
      _
    %p1987 = scmp.le.s32.totalorder 2, %s30
    // Predicated region
    $region133: #{tpu_custom_call.1} parent=5 // pred_check
      %p1988 = pneg %p1987
    $region134: #{tpu_custom_call.1} parent=5 // pred_check_branch
      %1990 = sbr.rel (%p1988) target = $region136
    $region135: #{tpu_custom_call.1} parent=5 // pred_region
      %s1991 = ssub.s32 %s30, 2
    $region136: #{tpu_custom_call.1} parent=5 // pred_fallthru
      _
  $region6: #{tpu_custom_call.1} parent=0 // loop_footer
    %s34 = sadd.s32 1, %s30
  $region7: #{tpu_custom_call.1} parent=0 // loop_footer_branch
    %29 = sbr.rel target = $region3
  $region8: #{tpu_custom_call.1} parent=0 // loop_exit
    _

</llo_original>
